<compile_context>
chip_gen: v7x
topology: tpu7x:2x2x1
jax: 0.10.0
libtpu: 0.0.40
codegen_flags: <defaults>
</compile_context>

<pallas_src>
import jax
import jax.numpy as jnp
from jax import lax
from jax.experimental import pallas as pl
from jax.experimental.pallas import tpu as pltpu


def _subpixel_conv_kernel(x_ref, w_ref, b_ref, a_ref, o_ref):
    # x_ref : (1, 1, tile_h+KH-1, Wc, KW*Cin)  halo'd, W-im2col'd input tile
    # w_ref : (KH, KW*Cin, Cout)               conv weights, one K-slab per dy
    # b_ref : (1, Cout)                        bias (f32, VMEM)
    # a_ref : (1,)                             PReLU slope (f32 scalar, SMEM)
    # o_ref : (1, 1, tile_h, Wc, Cout)         conv + bias + PReLU output tile
    KH = w_ref.shape[0]
    tH = o_ref.shape[2]
    Wc = o_ref.shape[3]
    Cout = o_ref.shape[4]
    K = x_ref.shape[4]

    # KH matmuls of (tile_h*Wc, KW*Cin) x (KW*Cin, Cout), f32 MXU accumulation.
    # Results are summed as values and stored once (no per-tap VMEM round trip).
    acc = jnp.dot(x_ref[0, 0, 0:tH].reshape(tH * Wc, K), w_ref[0],
                  preferred_element_type=jnp.float32)
    for dy in range(1, KH):
        acc = acc + jnp.dot(x_ref[0, 0, dy:dy + tH].reshape(tH * Wc, K),
                            w_ref[dy], preferred_element_type=jnp.float32)

    acc = acc + b_ref[0, :]                            # bias (f32)
    alpha = a_ref[0]                                   # SMEM scalar read
    acc = jnp.where(acc >= 0.0, acc, alpha * acc)      # PReLU (shared slope)
    o_ref[...] = acc.reshape(1, 1, tH, Wc, Cout).astype(o_ref.dtype)


def _round_up(a, b):
    return ((a + b - 1) // b) * b


def _vmem_capacity_bytes():
    try:
        return int(pltpu.get_tpu_info().vmem_capacity_bytes)
    except Exception:
        return 64 * 1024 * 1024      # conservative: v7x per-TensorCore VMEM


def subpixel_conv_block(x_nchw, weight, bias, alpha, scaling_factor=2, *,
                        tile_h=None, compute_dtype=None):
    """x_nchw: (N, Cin, H, W); weight: (Cout, Cin, KH, KW); bias: (Cout,);
    alpha: scalar PReLU slope.  Returns (N, Cin, H*s, W*s)."""
    N, Cin, H, W = x_nchw.shape
    Cout, Cin_w, KH, KW = weight.shape
    assert Cin_w == Cin
    s = scaling_factor
    ph, pw = KH // 2, KW // 2
    out_dtype = x_nchw.dtype
    if compute_dtype is None:
        compute_dtype = x_nchw.dtype

    in_b = jnp.dtype(compute_dtype).itemsize
    out_b = jnp.dtype(out_dtype).itemsize
    Kdim = KW * Cin

    # Pad W to the sublane multiple of the compute dtype so in-kernel reshapes
    # (tH, Wc, K) <-> (tH*Wc, K) are free sublane collapses.
    sub = {4: 8, 2: 16, 1: 32}.get(in_b, 8)
    Wc = _round_up(W, sub)

    # ---- dtype / generation aware H-tile sizing ---------------------------
    vmem_cap = _vmem_capacity_bytes()
    # per output row: 2x double-buffered im2col input rows, 2x output rows,
    # 1x f32 accumulator row.  fixed: weights + bias (double-buffered).
    per_row = Wc * (2 * Kdim * in_b + Cout * (2 * out_b + 4))
    fixed = 2 * (KH * Kdim * Cout * in_b) + 2 * (4 * Cout)
    auto_tile = tile_h is None
    if auto_tile:
        budget = min(int(0.55 * vmem_cap), 40 * 1024 * 1024)
        tile_h = max(1, (budget - fixed) // max(per_row, 1))
    tile_h = int(max(1, min(tile_h, H)))
    # v7x megacore: keep >= 2 grid steps when there is no batch parallelism.
    if auto_tile and N == 1 and tile_h >= H and H > 1:
        tile_h = int(pl.cdiv(H, 2))
    nH = int(pl.cdiv(H, tile_h))
    Hc = nH * tile_h                       # compute height (>= H, zero padded)
    halo_h = tile_h + KH - 1

    # Explicit scoped-VMEM limit (the defaults are far too small everywhere).
    ws = (2 * halo_h * Wc * Kdim * in_b
          + tile_h * Wc * Cout * (2 * out_b + 4)
          + fixed)
    vmem_limit = int(min(0.9 * vmem_cap, max(2 * ws + (16 << 20), 64 << 20)))

    # ---- wrapper-side layout glue (all static slices, single copy pass) ---
    # NCHW -> NHWC, cast early (bf16 path halves all large intermediates), pad.
    x = jnp.transpose(x_nchw, (0, 2, 3, 1)).astype(compute_dtype)   # (N,H,W,Cin)
    xpad = jnp.pad(x, ((0, 0), (ph, Hc - H + ph), (pw, Wc - W + pw), (0, 0)))
    # Halo'd H-tiles with W-axis im2col built together: channel = dx*Cin + ci.
    tiles = []
    for i in range(nH):
        r0 = i * tile_h
        taps = [xpad[:, r0:r0 + halo_h, dx:dx + Wc, :] for dx in range(KW)]
        tiles.append(jnp.concatenate(taps, axis=-1))
    xt = jnp.stack(tiles, axis=1)          # (N, nH, halo_h, Wc, KW*Cin)

    # (Cout, Cin, KH, KW) -> (KH, KW*Cin, Cout); K ordering matches xt.
    w_t = jnp.transpose(weight, (2, 3, 1, 0)).reshape(KH, Kdim, Cout)
    w_t = w_t.astype(compute_dtype)
    b = bias.reshape(1, Cout).astype(jnp.float32)
    a = jnp.asarray(alpha, jnp.float32).reshape(1)

    y = pl.pallas_call(
        _subpixel_conv_kernel,
        out_shape=jax.ShapeDtypeStruct((N, nH, tile_h, Wc, Cout), out_dtype),
        grid=(N, nH),
        in_specs=[
            pl.BlockSpec((1, 1, halo_h, Wc, Kdim), lambda n, i: (n, i, 0, 0, 0)),
            pl.BlockSpec((KH, Kdim, Cout), lambda n, i: (0, 0, 0)),
            pl.BlockSpec((1, Cout), lambda n, i: (0, 0)),
            pl.BlockSpec(memory_space=pltpu.MemorySpace.SMEM),   # PReLU slope
        ],
        out_specs=pl.BlockSpec((1, 1, tile_h, Wc, Cout),
                               lambda n, i: (n, i, 0, 0, 0)),
        compiler_params=pltpu.CompilerParams(
            dimension_semantics=("parallel", "parallel"),
            vmem_limit_bytes=vmem_limit),
    )(xt, w_t, b, a)

    # ---- PixelShuffle + NHWC -> NCHW: one reshape/transpose pass ----------
    y = y.reshape(N, Hc, Wc, Cout)[:, :H, :W]
    nc = Cout // (s * s)
    y = y.reshape(N, H, W, nc, s, s)
    y = jnp.transpose(y, (0, 3, 1, 4, 2, 5)).reshape(N, nc, H * s, W * s)
    return y


def _reference(x_nchw, weight, bias, alpha, s=2):
    """Pure-JAX reference matching the PyTorch forward exactly."""
    y = lax.conv_general_dilated(
        x_nchw, weight, window_strides=(1, 1), padding="SAME",
        dimension_numbers=("NCHW", "OIHW", "NCHW"))
    y = y + bias.reshape(1, -1, 1, 1)
    N, C, H, W = y.shape
    nc = C // (s * s)
    y = y.reshape(N, nc, s, s, H, W)
    y = jnp.transpose(y, (0, 1, 4, 2, 5, 3)).reshape(N, nc, H * s, W * s)
    return jnp.where(y >= 0.0, y, alpha * y)


if __name__ == "__main__":
    # Small, deterministic config: kernel_size=3, n_channels=4, scaling_factor=2
    kernel_size, n_channels, scaling_factor = 3, 4, 2
    N, H, W = 2, 16, 16
    Cout = n_channels * scaling_factor ** 2

    key = jax.random.PRNGKey(0)
    kx, kw, kb = jax.random.split(key, 3)
    x = jax.random.normal(kx, (N, n_channels, H, W), dtype=jnp.float32)
    weight = (jax.random.normal(kw, (Cout, n_channels, kernel_size, kernel_size),
                                dtype=jnp.float32) * 0.1)
    bias = jax.random.normal(kb, (Cout,), dtype=jnp.float32) * 0.1
    alpha = jnp.float32(0.25)  # PReLU default init

    ref = _reference(x, weight, bias, alpha, scaling_factor)

    # f32, auto tile_h (exercises the generation-aware sizing; grid (2, 1)).
    out = subpixel_conv_block(x, weight, bias, alpha, scaling_factor)
    out = jax.block_until_ready(out)
    assert out.shape == (N, n_channels, H * scaling_factor, W * scaling_factor)
    assert jnp.allclose(out, ref, atol=1e-4, rtol=1e-4), "f32 auto-tile mismatch"

    # f32, explicit tile_h=8 -> grid (2, 2), exercises the halo'd H-tiling.
    out_t = subpixel_conv_block(x, weight, bias, alpha, scaling_factor, tile_h=8)
    out_t = jax.block_until_ready(out_t)
    assert jnp.allclose(out_t, ref, atol=1e-4, rtol=1e-4), "f32 tiled mismatch"

    # bf16 compute path (halved HBM/VMEM bytes, 2x MXU rate) -- loose tolerance.
    out_bf16 = subpixel_conv_block(x, weight, bias, alpha, scaling_factor,
                                   tile_h=8, compute_dtype=jnp.bfloat16)
    out_bf16 = jax.block_until_ready(out_bf16)
    assert jnp.allclose(out_bf16, ref, atol=5e-2, rtol=5e-2), "bf16 mismatch"

    print("KERNEL_OK")
</pallas_src>

<mosaic_0001>
module attributes {stable_mosaic.version = 11 : i64} {
  func.func @_subpixel_conv_kernel(%arg0: i32, %arg1: i32, %arg2: memref<1x1x18x16x12xf32, #tpu.memory_space<vmem>>, %arg3: memref<3x12x16xf32, #tpu.memory_space<vmem>>, %arg4: memref<1x16xf32, #tpu.memory_space<vmem>>, %arg5: memref<1xf32, #tpu.memory_space<smem>>, %arg6: memref<1x1x16x16x16xf32, #tpu.memory_space<vmem>>) attributes {dimension_semantics = [#tpu.dimension_semantics<parallel>, #tpu.dimension_semantics<parallel>], iteration_bounds = array<i64: 2, 1>, scalar_prefetch = 0 : i64, scratch_operands = 0 : i64, tpu.core_type = #tpu.core_type<tc>, window_params = [{transform_indices = @transform_0, window_bounds = array<i64: 1, 1, 18, 16, 12>}, {pipeline_mode = #tpu.pipeline_mode<synchronous>, transform_indices = @transform_1, window_bounds = array<i64: 3, 12, 16>}, {pipeline_mode = #tpu.pipeline_mode<synchronous>, transform_indices = @transform_2, window_bounds = array<i64: 1, 16>}, {transform_indices = @transform_3, window_bounds = array<i64: 1>}, {transform_indices = @transform_4, window_bounds = array<i64: 1, 1, 16, 16, 16>}]} {
    %c0 = arith.constant 0 : index
    %c0_0 = arith.constant 0 : index
    %c0_1 = arith.constant 0 : index
    %c0_2 = arith.constant 0 : index
    %c0_3 = arith.constant 0 : index
    %0 = vector.load %arg2[%c0, %c0_0, %c0_1, %c0_2, %c0_3] : memref<1x1x18x16x12xf32, #tpu.memory_space<vmem>>, vector<1x1x16x16x12xf32>
    %1 = vector.shape_cast %0 : vector<1x1x16x16x12xf32> to vector<16x16x12xf32>
    %2 = vector.shape_cast %1 : vector<16x16x12xf32> to vector<256x12xf32>
    %c0_4 = arith.constant 0 : index
    %c0_5 = arith.constant 0 : index
    %c0_6 = arith.constant 0 : index
    %3 = vector.load %arg3[%c0_4, %c0_5, %c0_6] : memref<3x12x16xf32, #tpu.memory_space<vmem>>, vector<1x12x16xf32>
    %4 = vector.shape_cast %3 : vector<1x12x16xf32> to vector<12x16xf32>
    %cst = arith.constant dense<0.000000e+00> : vector<256x16xf32>
    %5 = tpu.matmul %2, %4, %cst {dimension_numbers = #tpu.dot_dimension_numbers<[1], [0], [0], [1], [0, 0, 1, 1], [], []>} : vector<256x12xf32>, vector<12x16xf32>, vector<256x16xf32> -> vector<256x16xf32>
    %c0_7 = arith.constant 0 : index
    %c0_8 = arith.constant 0 : index
    %c1 = arith.constant 1 : index
    %c0_9 = arith.constant 0 : index
    %c0_10 = arith.constant 0 : index
    %6 = vector.load %arg2[%c0_7, %c0_8, %c1, %c0_9, %c0_10] : memref<1x1x18x16x12xf32, #tpu.memory_space<vmem>>, vector<1x1x16x16x12xf32>
    %7 = vector.shape_cast %6 : vector<1x1x16x16x12xf32> to vector<16x16x12xf32>
    %8 = vector.shape_cast %7 : vector<16x16x12xf32> to vector<256x12xf32>
    %c1_11 = arith.constant 1 : index
    %c0_12 = arith.constant 0 : index
    %c0_13 = arith.constant 0 : index
    %9 = vector.load %arg3[%c1_11, %c0_12, %c0_13] : memref<3x12x16xf32, #tpu.memory_space<vmem>>, vector<1x12x16xf32>
    %10 = vector.shape_cast %9 : vector<1x12x16xf32> to vector<12x16xf32>
    %cst_14 = arith.constant dense<0.000000e+00> : vector<256x16xf32>
    %11 = tpu.matmul %8, %10, %cst_14 {dimension_numbers = #tpu.dot_dimension_numbers<[1], [0], [0], [1], [0, 0, 1, 1], [], []>} : vector<256x12xf32>, vector<12x16xf32>, vector<256x16xf32> -> vector<256x16xf32>
    %12 = arith.addf %5, %11 : vector<256x16xf32>
    %c0_15 = arith.constant 0 : index
    %c0_16 = arith.constant 0 : index
    %c2 = arith.constant 2 : index
    %c0_17 = arith.constant 0 : index
    %c0_18 = arith.constant 0 : index
    %13 = vector.load %arg2[%c0_15, %c0_16, %c2, %c0_17, %c0_18] : memref<1x1x18x16x12xf32, #tpu.memory_space<vmem>>, vector<1x1x16x16x12xf32>
    %14 = vector.shape_cast %13 : vector<1x1x16x16x12xf32> to vector<16x16x12xf32>
    %15 = vector.shape_cast %14 : vector<16x16x12xf32> to vector<256x12xf32>
    %c2_19 = arith.constant 2 : index
    %c0_20 = arith.constant 0 : index
    %c0_21 = arith.constant 0 : index
    %16 = vector.load %arg3[%c2_19, %c0_20, %c0_21] : memref<3x12x16xf32, #tpu.memory_space<vmem>>, vector<1x12x16xf32>
    %17 = vector.shape_cast %16 : vector<1x12x16xf32> to vector<12x16xf32>
    %cst_22 = arith.constant dense<0.000000e+00> : vector<256x16xf32>
    %18 = tpu.matmul %15, %17, %cst_22 {dimension_numbers = #tpu.dot_dimension_numbers<[1], [0], [0], [1], [0, 0, 1, 1], [], []>} : vector<256x12xf32>, vector<12x16xf32>, vector<256x16xf32> -> vector<256x16xf32>
    %19 = arith.addf %12, %18 : vector<256x16xf32>
    %c0_23 = arith.constant 0 : index
    %c0_24 = arith.constant 0 : index
    %20 = vector.load %arg4[%c0_23, %c0_24] : memref<1x16xf32, #tpu.memory_space<vmem>>, vector<1x16xf32>
    %21 = vector.shape_cast %20 : vector<1x16xf32> to vector<16xf32>
    %22 = vector.shape_cast %21 : vector<16xf32> to vector<1x16xf32>
    %23 = vector.broadcast %22 : vector<1x16xf32> to vector<256x16xf32>
    %24 = arith.addf %19, %23 : vector<256x16xf32>
    %c0_25 = arith.constant 0 : index
    %25 = memref.load %arg5[%c0_25] : memref<1xf32, #tpu.memory_space<smem>>
    %cst_26 = arith.constant 0.000000e+00 : f32
    %26 = vector.broadcast %cst_26 : f32 to vector<256x16xf32>
    %27 = arith.cmpf oge, %24, %26 : vector<256x16xf32>
    %28 = vector.broadcast %25 : f32 to vector<256x16xf32>
    %29 = arith.mulf %28, %24 : vector<256x16xf32>
    %30 = arith.select %27, %24, %29 : vector<256x16xi1>, vector<256x16xf32>
    %31 = vector.shape_cast %30 : vector<256x16xf32> to vector<1x1x16x16x16xf32>
    %c0_27 = arith.constant 0 : index
    %c0_28 = arith.constant 0 : index
    %c0_29 = arith.constant 0 : index
    %c0_30 = arith.constant 0 : index
    %c0_31 = arith.constant 0 : index
    %32 = vector.load %arg6[%c0_27, %c0_28, %c0_29, %c0_30, %c0_31] : memref<1x1x16x16x16xf32, #tpu.memory_space<vmem>>, vector<1x1x16x16x16xf32>
    tpu.vector_store %arg6[%c0_27, %c0_28, %c0_29, %c0_30, %c0_31], %31 {strides = array<i32>} : memref<1x1x16x16x16xf32, #tpu.memory_space<vmem>>, vector<1x1x16x16x16xf32>,
    return
  }
  func.func @transform_0(%arg0: i32, %arg1: i32) -> (i32, i32, i32, i32, i32) {
    %c0_i32 = arith.constant 0 : i32
    %c0_i32_0 = arith.constant 0 : i32
    %c0_i32_1 = arith.constant 0 : i32
    %c0_i32_2 = arith.constant 0 : i32
    return %arg0, %arg1, %c0_i32, %c0_i32_0, %c0_i32_1 : i32, i32, i32, i32, i32
  }
  func.func @transform_1(%arg0: i32, %arg1: i32) -> (i32, i32, i32) {
    %c0_i32 = arith.constant 0 : i32
    %c0_i32_0 = arith.constant 0 : i32
    %c0_i32_1 = arith.constant 0 : i32
    %c0_i32_2 = arith.constant 0 : i32
    return %c0_i32, %c0_i32_0, %c0_i32_1 : i32, i32, i32
  }
  func.func @transform_2(%arg0: i32, %arg1: i32) -> (i32, i32) {
    %c0_i32 = arith.constant 0 : i32
    %c0_i32_0 = arith.constant 0 : i32
    %c0_i32_1 = arith.constant 0 : i32
    return %c0_i32, %c0_i32_0 : i32, i32
  }
  func.func @transform_3(%arg0: i32, %arg1: i32) -> i32 {
    %c0_i32 = arith.constant 0 : i32
    %c0_i32_0 = arith.constant 0 : i32
    return %c0_i32 : i32
  }
  func.func @transform_4(%arg0: i32, %arg1: i32) -> (i32, i32, i32, i32, i32) {
    %c0_i32 = arith.constant 0 : i32
    %c0_i32_0 = arith.constant 0 : i32
    %c0_i32_1 = arith.constant 0 : i32
    %c0_i32_2 = arith.constant 0 : i32
    return %arg0, %arg1, %c0_i32, %c0_i32_0, %c0_i32_1 : i32, i32, i32, i32, i32
  }
}

</mosaic_0001>

<llo_original>
// kernel: tpu_custom_call.1
$region0: #{tpu_custom_call.1}
  #allocation0 [shape = 'u32[]', space=smem, size = 0x4, offset = 0x4, fixed_abs, tag = 'smem constant byte address 0x4 - core index']
  #allocation1 [shape = 'u32[144,128]{1,0:T(1,128)}', space=vmem, size = 0x12000, scoped, tag = 'internal scratch']
  #allocation2 [shape = 'f32[1]{0:T(128)S(6)}', space=smem, size = 0x200, scoped, tag = 'scoped memory for tpu_custom_call.1']
  %s0 = inlined_call_operand.vmem [shape: f32[2,1,18,16,12], index: 0, kind: input, shape index: {}]
  %s1 = inlined_call_operand.vmem [shape: f32[3,12,16], index: 1, kind: input, shape index: {}]
  %s2 = inlined_call_operand.vmem [shape: f32[1,16], index: 2, kind: input, shape index: {}]
  %s3 = inlined_call_operand.<no memory space> [shape: f32[1], index: 3, kind: input, shape index: {}]
  %s4 = inlined_call_operand.hbm [shape: f32[2,1,16,16,16], index: 4, kind: output, shape index: {}]
  %s5 = sld [smem:[#allocation0]]
  $region49: #{tpu_custom_call.1} parent=0
    _
  %s7 = ssub.s32 1, %s5
  %s8 = scalar_select 0, %s7, %s5
  %9 = sst [smem:[#allocation2]] %s3
  $region1: #{tpu_custom_call.1} parent=0
    #allocation3 [shape = 'u8[262144]{0}', space=vmem, size = 0x40000, scoped, tag = 'output window, operand 0']
    #allocation4 [shape = 's32[2]{0}', space=sflag, size = 0x8, scoped, tag = 'scoped memory for tpu_custom_call.1']
    %10 = vsyncpa [#allocation4], 0
    %s11 = scalar_lea.sflag [#allocation4], 1
    %12 = vsyncpa %s11, 0
    loop: start=0, step=1, limit=4
    $region2: #{tpu_custom_call.1} parent=1 // loop_pre_header
      _
    $region3: #{tpu_custom_call.1} parent=1 // loop_header
      %s14 = sphi 0, %s18
      %p15 = scmp.ge.s32.totalorder %s14, 4
      %s21 = sphi 0, %s33
      %s22 = sphi 0, %s29
      %s23 = sphi 0, %s21
      %s24 = sphi 0, %s22
      %s25 = sphi 0, %s23
      %s26 = sphi 0, %s24
      %s38 = sphi 0, %s40
      %s41 = sphi 0, %s38
      %s42 = sphi 0, %s41
      %s58 = sphi 0, %s42
      %s62 = sphi 0, %s62
      %s64 = sphi 0, %s62
      %s65 = sphi 0, %s64
      %s79 = sphi 0, %s65
      %s83 = sphi 0, %s83
      %s85 = sphi 0, %s83
      %s86 = sphi 0, %s85
      %s100 = sphi 0, %s86
      %s104 = sphi 0, %s104
      %s106 = sphi 0, %s104
      %s107 = sphi 0, %s106
      %s121 = sphi 0, %s107
      %s129 = sphi 0, %s131
      %s132 = sphi 0, %s129
      %s133 = sphi 0, %s132
      %s149 = sphi 0, %s133
    $region4: #{tpu_custom_call.1} parent=1 // loop_header_branch
      %17 = sbr.rel (%p15) target = $region8
    $region5: #{tpu_custom_call.1} parent=1 // loop_body
      %s19 = ssub.s32 %s14, 1
      %s20 = ssub.s32 %s14, 2
      %s27 = sadd.s32 1, %s22
      %p28 = scmp.ge.s32.totalorder %s27, 1
      %s29 = scalar_select %p28, 0, %s27
      %s30 = sadd.s32 1, %s21
      %s31 = scalar_select %p28, %s30, %s21
      %p32 = scmp.ge.s32.totalorder %s31, 2
      %s33 = scalar_select %p32, 0, %s31
      %s34 = ssub.s32 %s21, %s33
      %s35 = ssub.s32 %s22, %s29
      %s36 = sor.u32 %s34, %s35
      %p37 = scmp.eq.s32.totalorder %s36, 0
      %s39 = sadd.s32 %s38, 1
      %s40 = scalar_select %p37, %s38, %s39
      %p43 = pneg %p37
      %p44 = scmp.eq.s32.totalorder %s14, 1
      %p45 = por %p43, %p44
      %p46 = scmp.ne.s32.totalorder %s38, %s41
      %p47 = scmp.eq.s32.totalorder %s14, 0
      %p48 = por %p46, %p47
      %p49 = scmp.ne.s32.totalorder %s38, %s41
      %p50 = scmp.eq.s32.totalorder %s19, 1
      %p51 = por %p49, %p50
      %p52 = scmp.ne.s32.totalorder %s41, %s42
      %p53 = scmp.eq.s32.totalorder %s19, 0
      %p54 = por %p52, %p53
      %p55 = scmp.ne.s32.totalorder %s41, %s42
      %p56 = scmp.eq.s32.totalorder %s20, 1
      %p57 = por %p55, %p56
      %p59 = scmp.ne.s32.totalorder %s42, %s58
      %p60 = scmp.eq.s32.totalorder %s20, 0
      %p61 = por %p59, %p60
      %s63 = sadd.s32 %s62, 1
      %p66 = scmp.eq.s32.totalorder %s14, 1
      %p67 = scmp.ne.s32.totalorder %s62, %s64
      %p68 = scmp.eq.s32.totalorder %s14, 0
      %p69 = por %p67, %p68
      %p70 = scmp.ne.s32.totalorder %s62, %s64
      %p71 = scmp.eq.s32.totalorder %s19, 1
      %p72 = por %p70, %p71
      %p73 = scmp.ne.s32.totalorder %s64, %s65
      %p74 = scmp.eq.s32.totalorder %s19, 0
      %p75 = por %p73, %p74
      %p76 = scmp.ne.s32.totalorder %s64, %s65
      %p77 = scmp.eq.s32.totalorder %s20, 1
      %p78 = por %p76, %p77
      %p80 = scmp.ne.s32.totalorder %s65, %s79
      %p81 = scmp.eq.s32.totalorder %s20, 0
      %p82 = por %p80, %p81
      %s84 = sadd.s32 %s83, 1
      %p87 = scmp.eq.s32.totalorder %s14, 1
      %p88 = scmp.ne.s32.totalorder %s83, %s85
      %p89 = scmp.eq.s32.totalorder %s14, 0
      %p90 = por %p88, %p89
      %p91 = scmp.ne.s32.totalorder %s83, %s85
      %p92 = scmp.eq.s32.totalorder %s19, 1
      %p93 = por %p91, %p92
      %p94 = scmp.ne.s32.totalorder %s85, %s86
      %p95 = scmp.eq.s32.totalorder %s19, 0
      %p96 = por %p94, %p95
      %p97 = scmp.ne.s32.totalorder %s85, %s86
      %p98 = scmp.eq.s32.totalorder %s20, 1
      %p99 = por %p97, %p98
      %p101 = scmp.ne.s32.totalorder %s86, %s100
      %p102 = scmp.eq.s32.totalorder %s20, 0
      %p103 = por %p101, %p102
      %s105 = sadd.s32 %s104, 1
      %p108 = scmp.eq.s32.totalorder %s14, 1
      %p109 = scmp.ne.s32.totalorder %s104, %s106
      %p110 = scmp.eq.s32.totalorder %s14, 0
      %p111 = por %p109, %p110
      %p112 = scmp.ne.s32.totalorder %s104, %s106
      %p113 = scmp.eq.s32.totalorder %s19, 1
      %p114 = por %p112, %p113
      %p115 = scmp.ne.s32.totalorder %s106, %s107
      %p116 = scmp.eq.s32.totalorder %s19, 0
      %p117 = por %p115, %p116
      %p118 = scmp.ne.s32.totalorder %s106, %s107
      %p119 = scmp.eq.s32.totalorder %s20, 1
      %p120 = por %p118, %p119
      %p122 = scmp.ne.s32.totalorder %s107, %s121
      %p123 = scmp.eq.s32.totalorder %s20, 0
      %p124 = por %p122, %p123
      %s125 = ssub.s32 %s21, %s33
      %s126 = ssub.s32 %s22, %s29
      %s127 = sor.u32 %s125, %s126
      %p128 = scmp.eq.s32.totalorder %s127, 0
      %s130 = sadd.s32 %s129, 1
      %s131 = scalar_select %p128, %s129, %s130
      %p134 = pneg %p128
      %p135 = scmp.eq.s32.totalorder %s14, 1
      %p136 = por %p134, %p135
      %p137 = scmp.ne.s32.totalorder %s129, %s132
      %p138 = scmp.eq.s32.totalorder %s14, 0
      %p139 = por %p137, %p138
      %p140 = scmp.ne.s32.totalorder %s129, %s132
      %p141 = scmp.eq.s32.totalorder %s19, 1
      %p142 = por %p140, %p141
      %p143 = scmp.ne.s32.totalorder %s132, %s133
      %p144 = scmp.eq.s32.totalorder %s19, 0
      %p145 = por %p143, %p144
      %p146 = scmp.ne.s32.totalorder %s132, %s133
      %p147 = scmp.eq.s32.totalorder %s20, 1
      %p148 = por %p146, %p147
      %p150 = scmp.ne.s32.totalorder %s133, %s149
      %p151 = scmp.eq.s32.totalorder %s20, 0
      %p152 = por %p150, %p151
      %p153 = scmp.le.s32.totalorder 1, %s14
      %p154 = scmp.lt.s32.totalorder %s14, 3
      %p155 = pnand %p153, %p154
      %p156 = pneg %p155
      // Predicated region
      $region9: #{tpu_custom_call.1} parent=5 // pred_check
        _
      $region10: #{tpu_custom_call.1} parent=5 // pred_check_branch
        %158 = sbr.rel (%p155) target = $region12
      $region11: #{tpu_custom_call.1} parent=5 // pred_region
        %s159 = ssub.s32 %s14, 1
        // Predicated region
        $region13: #{tpu_custom_call.1} parent=11 // pred_check
          %p160 = pneg %p75
        $region14: #{tpu_custom_call.1} parent=11 // pred_check_branch
          %162 = sbr.rel (%p160) target = $region16
        $region15: #{tpu_custom_call.1} parent=11 // pred_region
          _
        $region16: #{tpu_custom_call.1} parent=11 // pred_fallthru
          _
        // Predicated region
        $region17: #{tpu_custom_call.1} parent=11 // pred_check
          %p163 = pneg %p96
        $region18: #{tpu_custom_call.1} parent=11 // pred_check_branch
          %165 = sbr.rel (%p163) target = $region20
        $region19: #{tpu_custom_call.1} parent=11 // pred_region
          _
        $region20: #{tpu_custom_call.1} parent=11 // pred_fallthru
          _
        // Predicated region
        $region21: #{tpu_custom_call.1} parent=11 // pred_check
          %p166 = pneg %p117
        $region22: #{tpu_custom_call.1} parent=11 // pred_check_branch
          %168 = sbr.rel (%p166) target = $region24
        $region23: #{tpu_custom_call.1} parent=11 // pred_region
          _
        $region24: #{tpu_custom_call.1} parent=11 // pred_fallthru
          _
      $region12: #{tpu_custom_call.1} parent=5 // pred_fallthru
        _
      %p169 = scmp.lt.s32.totalorder %s14, 2
      // Predicated region
      $region25: #{tpu_custom_call.1} parent=5 // pred_check
        %p170 = pneg %p169
      $region26: #{tpu_custom_call.1} parent=5 // pred_check_branch
        %172 = sbr.rel (%p170) target = $region28
      $region27: #{tpu_custom_call.1} parent=5 // pred_region
        // Predicated region
        $region29: #{tpu_custom_call.1} parent=27 // pred_check
          %p173 = pneg %p48
        $region30: #{tpu_custom_call.1} parent=27 // pred_check_branch
          %175 = sbr.rel (%p173) target = $region32
        $region31: #{tpu_custom_call.1} parent=27 // pred_region
          %p176 = scmp.lt.s32.totalorder %s21, 1
          %s177 = scalar_select %p176, %s21, 1
          %p178 = scmp.lt.s32.totalorder %s22, 0
          %s179 = scalar_select %p178, %s22, 0
          %s180 = smul.addr %s179, 36
          %s181 = smul.addr %s177, 36
          %s182 = sadd.s32 %s180, %s181
          %s183 = smul.addr %s182, 8
          %s184 = scalar_lea.vmem %s0, %s183
        $region32: #{tpu_custom_call.1} parent=27 // pred_fallthru
          _
      $region28: #{tpu_custom_call.1} parent=5 // pred_fallthru
        _
      %p185 = scmp.le.s32.totalorder 1, %s14
      %p186 = scmp.lt.s32.totalorder %s14, 3
      %p187 = pnand %p185, %p186
      %p188 = pneg %p187
      // Predicated region
      $region33: #{tpu_custom_call.1} parent=5 // pred_check
        _
      $region34: #{tpu_custom_call.1} parent=5 // pred_check_branch
        %190 = sbr.rel (%p187) target = $region36
      $region35: #{tpu_custom_call.1} parent=5 // pred_region
        %s191 = ssub.s32 %s14, 1
        %p192 = scmp.lt.s32.totalorder %s23, 1
        %s193 = scalar_select %p192, %s23, 1
        %p194 = scmp.lt.s32.totalorder %s24, 0
        %s195 = scalar_select %p194, %s24, 0
        %s196 = smul.addr %s195, 36
        %s197 = smul.addr %s193, 36
        %s198 = sadd.s32 %s196, %s197
        %s199 = smul.addr %s198, 8
        %s200 = scalar_lea.vmem %s0, %s199
        %p201 = pneg %p54
        %p202 = pneg %p51
        %p203 = pneg %p75
        %p204 = pneg %p72
        %p205 = pneg %p96
        %p206 = pneg %p93
        %p207 = pneg %p117
        %p208 = pneg %p114
        %p209 = pneg %p145
        %p210 = pneg %p142
        %s211 = sand.u32 %s132, 1
        %s212 = scalar_lea.sflag [#allocation4], %s211
        %s213 = sand.u32 %s132, 1
        %s214 = smul.addr %s213, 256
        %s215 = scalar_lea.vmem [#allocation3], %s214
        %p216 = scmp.lt.s32.totalorder %s23, 1
        %s217 = scalar_select %p216, %s23, 1
        %p218 = scmp.lt.s32.totalorder %s24, 0
        %s219 = scalar_select %p218, %s24, 0
        %s220 = smul.addr %s219, 36
        %s221 = smul.addr %s217, 36
        %s222 = sadd.s32 %s220, %s221
        %s223 = smul.addr %s222, 8
        %s224 = scalar_lea.vmem %s0, %s223
        %v225 = vld [vmem:[%s224] sm:$0xff]
        %v226 = vld [vmem:[%s224 + $0x8] sm:$0xff]
        %v227 = vld [vmem:[%s224 + $0x10] sm:$0xff]
        %v228 = vld [vmem:[%s224 + $0x18] sm:$0xff]
        %v229 = vld [vmem:[%s224 + $0x20] sm:$0xff]
        %v230 = vld [vmem:[%s224 + $0x28] sm:$0xff]
        %v231 = vld [vmem:[%s224 + $0x30] sm:$0xff]
        %v232 = vld [vmem:[%s224 + $0x38] sm:$0xff]
        %v233 = vld [vmem:[%s224 + $0x40] sm:$0xff]
        %v234 = vld [vmem:[%s224 + $0x48] sm:$0xff]
        %v235 = vld [vmem:[%s224 + $0x50] sm:$0xff]
        %v236 = vld [vmem:[%s224 + $0x58] sm:$0xff]
        %v237 = vld [vmem:[%s224 + $0x60] sm:$0xff]
        %v238 = vld [vmem:[%s224 + $0x68] sm:$0xff]
        %v239 = vld [vmem:[%s224 + $0x70] sm:$0xff]
        %v240 = vld [vmem:[%s224 + $0x78] sm:$0xff]
        %v241 = vld [vmem:[%s224 + $0x80] sm:$0xff]
        %v242 = vld [vmem:[%s224 + $0x88] sm:$0xff]
        %v243 = vld [vmem:[%s224 + $0x90] sm:$0xff]
        %v244 = vld [vmem:[%s224 + $0x98] sm:$0xff]
        %v245 = vld [vmem:[%s224 + $0xa0] sm:$0xff]
        %v246 = vld [vmem:[%s224 + $0xa8] sm:$0xff]
        %v247 = vld [vmem:[%s224 + $0xb0] sm:$0xff]
        %v248 = vld [vmem:[%s224 + $0xb8] sm:$0xff]
        %v249 = vld [vmem:[%s224 + $0xc0] sm:$0xff]
        %v250 = vld [vmem:[%s224 + $0xc8] sm:$0xff]
        %v251 = vld [vmem:[%s224 + $0xd0] sm:$0xff]
        %v252 = vld [vmem:[%s224 + $0xd8] sm:$0xff]
        %v253 = vld [vmem:[%s224 + $0xe0] sm:$0xff]
        %v254 = vld [vmem:[%s224 + $0xe8] sm:$0xff]
        %v255 = vld [vmem:[%s224 + $0xf0] sm:$0xff]
        %v256 = vld [vmem:[%s224 + $0xf8] sm:$0xff]
        %v257 = vld [vmem:[%s1] sm:$0xff]
        %v258 = vld [vmem:[%s1 + $0x8] sm:$0xf]
        %s259 = scalar_lea.vmem %s224, 16
        %v260 = vld [vmem:[%s259] sm:$0xff]
        %v261 = vld [vmem:[%s259 + $0x8] sm:$0xff]
        %v262 = vld [vmem:[%s259 + $0x10] sm:$0xff]
        %v263 = vld [vmem:[%s259 + $0x18] sm:$0xff]
        %v264 = vld [vmem:[%s259 + $0x20] sm:$0xff]
        %v265 = vld [vmem:[%s259 + $0x28] sm:$0xff]
        %v266 = vld [vmem:[%s259 + $0x30] sm:$0xff]
        %v267 = vld [vmem:[%s259 + $0x38] sm:$0xff]
        %v268 = vld [vmem:[%s259 + $0x40] sm:$0xff]
        %v269 = vld [vmem:[%s259 + $0x48] sm:$0xff]
        %v270 = vld [vmem:[%s259 + $0x50] sm:$0xff]
        %v271 = vld [vmem:[%s259 + $0x58] sm:$0xff]
        %v272 = vld [vmem:[%s259 + $0x60] sm:$0xff]
        %v273 = vld [vmem:[%s259 + $0x68] sm:$0xff]
        %v274 = vld [vmem:[%s259 + $0x70] sm:$0xff]
        %v275 = vld [vmem:[%s259 + $0x78] sm:$0xff]
        %v276 = vld [vmem:[%s259 + $0x80] sm:$0xff]
        %v277 = vld [vmem:[%s259 + $0x88] sm:$0xff]
        %v278 = vld [vmem:[%s259 + $0x90] sm:$0xff]
        %v279 = vld [vmem:[%s259 + $0x98] sm:$0xff]
        %v280 = vld [vmem:[%s259 + $0xa0] sm:$0xff]
        %v281 = vld [vmem:[%s259 + $0xa8] sm:$0xff]
        %v282 = vld [vmem:[%s259 + $0xb0] sm:$0xff]
        %v283 = vld [vmem:[%s259 + $0xb8] sm:$0xff]
        %v284 = vld [vmem:[%s259 + $0xc0] sm:$0xff]
        %v285 = vld [vmem:[%s259 + $0xc8] sm:$0xff]
        %v286 = vld [vmem:[%s259 + $0xd0] sm:$0xff]
        %v287 = vld [vmem:[%s259 + $0xd8] sm:$0xff]
        %v288 = vld [vmem:[%s259 + $0xe0] sm:$0xff]
        %v289 = vld [vmem:[%s259 + $0xe8] sm:$0xff]
        %v290 = vld [vmem:[%s259 + $0xf0] sm:$0xff]
        %v291 = vld [vmem:[%s259 + $0xf8] sm:$0xff]
        %s292 = scalar_lea.vmem %s1, 16
        %v293 = vld [vmem:[%s292] sm:$0xff]
        %v294 = vld [vmem:[%s292 + $0x8] sm:$0xf]
        %vm295 = vcmask 97280
        %v297 = vsel %vm295, %v260, 0
        %v300 = vsel %vm295, %v261, 0
        %v303 = vsel %vm295, %v262, 0
        %v306 = vsel %vm295, %v263, 0
        %v309 = vsel %vm295, %v264, 0
        %v312 = vsel %vm295, %v265, 0
        %v315 = vsel %vm295, %v266, 0
        %v318 = vsel %vm295, %v267, 0
        %v321 = vsel %vm295, %v268, 0
        %v324 = vsel %vm295, %v269, 0
        %v327 = vsel %vm295, %v270, 0
        %v330 = vsel %vm295, %v271, 0
        %v333 = vsel %vm295, %v272, 0
        %v336 = vsel %vm295, %v273, 0
        %v339 = vsel %vm295, %v274, 0
        %v342 = vsel %vm295, %v275, 0
        %v345 = vsel %vm295, %v276, 0
        %v348 = vsel %vm295, %v277, 0
        %v351 = vsel %vm295, %v278, 0
        %v354 = vsel %vm295, %v279, 0
        %v357 = vsel %vm295, %v280, 0
        %v360 = vsel %vm295, %v281, 0
        %v363 = vsel %vm295, %v282, 0
        %v366 = vsel %vm295, %v283, 0
        %v369 = vsel %vm295, %v284, 0
        %v372 = vsel %vm295, %v285, 0
        %v375 = vsel %vm295, %v286, 0
        %v378 = vsel %vm295, %v287, 0
        %v381 = vsel %vm295, %v288, 0
        %v384 = vsel %vm295, %v289, 0
        %v387 = vsel %vm295, %v290, 0
        %v390 = vsel %vm295, %v291, 0
        %vm392 = vcmask 1043456
        %v394 = vsel %vm392, %v294, 0
        %396 = vmatprep.subr.mxu0 0.0
        %397 = vmatpush1.msra.mxu0 %v293
        %398 = vmatprep.subr.mxu0 0.0
        %399 = vmatpush1.msra.mxu0 %v394
        %400 = vmatprep.subr.mxu0 0.0
        %401 = vmatpush1.msra.mxu0 0.0
        %402 = vmatprep.subr.mxu0 0.0
        %403 = vmatpush1.msra.mxu0 0.0
        %404 = vmatprep.subr.mxu0 0.0
        %405 = vmatpush1.msra.mxu0 0.0
        %406 = vmatprep.subr.mxu0 0.0
        %407 = vmatpush1.msra.mxu0 0.0
        %408 = vmatprep.subr.mxu0 0.0
        %409 = vmatpush1.msra.mxu0 0.0
        %410 = vmatprep.subr.mxu0 0.0
        %411 = vmatpush1.msra.mxu0 0.0
        %412 = vmatprep.subr.mxu0 0.0
        %413 = vmatpush1.msra.mxu0 0.0
        %414 = vmatprep.subr.mxu0 0.0
        %415 = vmatpush1.msra.mxu0 0.0
        %416 = vmatprep.subr.mxu0 0.0
        %417 = vmatpush1.msra.mxu0 0.0
        %418 = vmatprep.subr.mxu0 0.0
        %419 = vmatpush1.msra.mxu0 0.0
        %420 = vmatprep.subr.mxu0 0.0
        %421 = vmatpush1.msra.mxu0 0.0
        %422 = vmatprep.subr.mxu0 0.0
        %423 = vmatpush1.msra.mxu0 0.0
        %424 = vmatprep.subr.mxu0 0.0
        %425 = vmatpush1.msra.mxu0 0.0
        %426 = vmatprep.subr.mxu0 0.0
        %427 = vmatpush1.msra.mxu0 0.0
        %428 = vmatprep.subr.mxu0 0.0
        %429 = vmatpush1.msra.mxu0 0.0
        %430 = vmatprep.subr.mxu0 0.0
        %431 = vmatpush1.msra.mxu0 0.0
        %432 = vmatprep.subr.mxu0 0.0
        %433 = vmatpush1.msra.mxu0 0.0
        %434 = vmatprep.subr.mxu0 0.0
        %435 = vmatpush1.msra.mxu0 0.0
        %436 = vmatprep.subr.mxu0 0.0
        %437 = vmatpush1.msra.mxu0 0.0
        %438 = vmatprep.subr.mxu0 0.0
        %439 = vmatpush1.msra.mxu0 0.0
        %440 = vmatprep.subr.mxu0 0.0
        %441 = vmatpush1.msra.mxu0 0.0
        %442 = vmatprep.subr.mxu0 0.0
        %443 = vmatpush1.msra.mxu0 0.0
        %444 = vmatprep.subr.mxu0 0.0
        %445 = vmatpush1.msra.mxu0 0.0
        %446 = vmatprep.subr.mxu0 0.0
        %447 = vmatpush1.msra.mxu0 0.0
        %448 = vmatprep.subr.mxu0 0.0
        %449 = vmatpush1.msra.mxu0 0.0
        %450 = vmatprep.subr.mxu0 0.0
        %451 = vmatpush1.msra.mxu0 0.0
        %452 = vmatprep.subr.mxu0 0.0
        %453 = vmatpush1.msra.mxu0 0.0
        %454 = vmatprep.subr.mxu0 0.0
        %455 = vmatpush1.msra.mxu0 0.0
        %456 = vmatprep.subr.mxu0 0.0
        %457 = vmatpush1.msra.mxu0 0.0
        %458 = vmatprep.subr.mxu0 0.0
        %459 = vmatpush1.msra.mxu0 0.0
        %460 = vmatprep.mubr.f32.mxu0 0.0
        %461 = vmatmul.mubr.f32.gmra.mrb[0].mxu0 %v297
        %v462 = vpop.f32.mrb[0].mxu0
        %v463 = vadd.f32 0.0, %v462
        %v464 = vpop.f32.mrb[0].mxu0
        %465 = vmatprep.mubr.f32.mxu0 0.0
        %466 = vmatmul.mubr.f32.gmra.mrb[0].mxu0 %v300
        %v467 = vpop.f32.mrb[0].mxu0
        %v468 = vadd.f32 0.0, %v467
        %v469 = vpop.f32.mrb[0].mxu0
        %470 = vmatprep.mubr.f32.mxu0 0.0
        %471 = vmatmul.mubr.f32.gmra.mrb[0].mxu0 %v303
        %v472 = vpop.f32.mrb[0].mxu0
        %v473 = vadd.f32 0.0, %v472
        %v474 = vpop.f32.mrb[0].mxu0
        %475 = vmatprep.mubr.f32.mxu0 0.0
        %476 = vmatmul.mubr.f32.gmra.mrb[0].mxu0 %v306
        %v477 = vpop.f32.mrb[0].mxu0
        %v478 = vadd.f32 0.0, %v477
        %v479 = vpop.f32.mrb[0].mxu0
        %480 = vmatprep.mubr.f32.mxu0 0.0
        %481 = vmatmul.mubr.f32.gmra.mrb[0].mxu0 %v309
        %v482 = vpop.f32.mrb[0].mxu0
        %v483 = vadd.f32 0.0, %v482
        %v484 = vpop.f32.mrb[0].mxu0
        %485 = vmatprep.mubr.f32.mxu0 0.0
        %486 = vmatmul.mubr.f32.gmra.mrb[0].mxu0 %v312
        %v487 = vpop.f32.mrb[0].mxu0
        %v488 = vadd.f32 0.0, %v487
        %v489 = vpop.f32.mrb[0].mxu0
        %490 = vmatprep.mubr.f32.mxu0 0.0
        %491 = vmatmul.mubr.f32.gmra.mrb[0].mxu0 %v315
        %v492 = vpop.f32.mrb[0].mxu0
        %v493 = vadd.f32 0.0, %v492
        %v494 = vpop.f32.mrb[0].mxu0
        %495 = vmatprep.mubr.f32.mxu0 0.0
        %496 = vmatmul.mubr.f32.gmra.mrb[0].mxu0 %v318
        %v497 = vpop.f32.mrb[0].mxu0
        %v498 = vadd.f32 0.0, %v497
        %v499 = vpop.f32.mrb[0].mxu0
        %500 = vmatprep.mubr.f32.mxu0 0.0
        %501 = vmatmul.mubr.f32.gmra.mrb[0].mxu0 %v321
        %v502 = vpop.f32.mrb[0].mxu0
        %v503 = vadd.f32 0.0, %v502
        %v504 = vpop.f32.mrb[0].mxu0
        %505 = vmatprep.mubr.f32.mxu0 0.0
        %506 = vmatmul.mubr.f32.gmra.mrb[0].mxu0 %v324
        %v507 = vpop.f32.mrb[0].mxu0
        %v508 = vadd.f32 0.0, %v507
        %v509 = vpop.f32.mrb[0].mxu0
        %510 = vmatprep.mubr.f32.mxu0 0.0
        %511 = vmatmul.mubr.f32.gmra.mrb[0].mxu0 %v327
        %v512 = vpop.f32.mrb[0].mxu0
        %v513 = vadd.f32 0.0, %v512
        %v514 = vpop.f32.mrb[0].mxu0
        %515 = vmatprep.mubr.f32.mxu0 0.0
        %516 = vmatmul.mubr.f32.gmra.mrb[0].mxu0 %v330
        %v517 = vpop.f32.mrb[0].mxu0
        %v518 = vadd.f32 0.0, %v517
        %v519 = vpop.f32.mrb[0].mxu0
        %520 = vmatprep.mubr.f32.mxu0 0.0
        %521 = vmatmul.mubr.f32.gmra.mrb[0].mxu0 %v333
        %v522 = vpop.f32.mrb[0].mxu0
        %v523 = vadd.f32 0.0, %v522
        %v524 = vpop.f32.mrb[0].mxu0
        %525 = vmatprep.mubr.f32.mxu0 0.0
        %526 = vmatmul.mubr.f32.gmra.mrb[0].mxu0 %v336
        %v527 = vpop.f32.mrb[0].mxu0
        %v528 = vadd.f32 0.0, %v527
        %v529 = vpop.f32.mrb[0].mxu0
        %530 = vmatprep.mubr.f32.mxu0 0.0
        %531 = vmatmul.mubr.f32.gmra.mrb[0].mxu0 %v339
        %v532 = vpop.f32.mrb[0].mxu0
        %v533 = vadd.f32 0.0, %v532
        %v534 = vpop.f32.mrb[0].mxu0
        %535 = vmatprep.mubr.f32.mxu0 0.0
        %536 = vmatmul.mubr.f32.gmra.mrb[0].mxu0 %v342
        %v537 = vpop.f32.mrb[0].mxu0
        %v538 = vadd.f32 0.0, %v537
        %v539 = vpop.f32.mrb[0].mxu0
        %540 = vmatprep.mubr.f32.mxu0 0.0
        %541 = vmatmul.mubr.f32.gmra.mrb[0].mxu0 %v345
        %v542 = vpop.f32.mrb[0].mxu0
        %v543 = vadd.f32 0.0, %v542
        %v544 = vpop.f32.mrb[0].mxu0
        %545 = vmatprep.mubr.f32.mxu0 0.0
        %546 = vmatmul.mubr.f32.gmra.mrb[0].mxu0 %v348
        %v547 = vpop.f32.mrb[0].mxu0
        %v548 = vadd.f32 0.0, %v547
        %v549 = vpop.f32.mrb[0].mxu0
        %550 = vmatprep.mubr.f32.mxu0 0.0
        %551 = vmatmul.mubr.f32.gmra.mrb[0].mxu0 %v351
        %v552 = vpop.f32.mrb[0].mxu0
        %v553 = vadd.f32 0.0, %v552
        %v554 = vpop.f32.mrb[0].mxu0
        %555 = vmatprep.mubr.f32.mxu0 0.0
        %556 = vmatmul.mubr.f32.gmra.mrb[0].mxu0 %v354
        %v557 = vpop.f32.mrb[0].mxu0
        %v558 = vadd.f32 0.0, %v557
        %v559 = vpop.f32.mrb[0].mxu0
        %560 = vmatprep.mubr.f32.mxu0 0.0
        %561 = vmatmul.mubr.f32.gmra.mrb[0].mxu0 %v357
        %v562 = vpop.f32.mrb[0].mxu0
        %v563 = vadd.f32 0.0, %v562
        %v564 = vpop.f32.mrb[0].mxu0
        %565 = vmatprep.mubr.f32.mxu0 0.0
        %566 = vmatmul.mubr.f32.gmra.mrb[0].mxu0 %v360
        %v567 = vpop.f32.mrb[0].mxu0
        %v568 = vadd.f32 0.0, %v567
        %v569 = vpop.f32.mrb[0].mxu0
        %570 = vmatprep.mubr.f32.mxu0 0.0
        %571 = vmatmul.mubr.f32.gmra.mrb[0].mxu0 %v363
        %v572 = vpop.f32.mrb[0].mxu0
        %v573 = vadd.f32 0.0, %v572
        %v574 = vpop.f32.mrb[0].mxu0
        %575 = vmatprep.mubr.f32.mxu0 0.0
        %576 = vmatmul.mubr.f32.gmra.mrb[0].mxu0 %v366
        %v577 = vpop.f32.mrb[0].mxu0
        %v578 = vadd.f32 0.0, %v577
        %v579 = vpop.f32.mrb[0].mxu0
        %580 = vmatprep.mubr.f32.mxu0 0.0
        %581 = vmatmul.mubr.f32.gmra.mrb[0].mxu0 %v369
        %v582 = vpop.f32.mrb[0].mxu0
        %v583 = vadd.f32 0.0, %v582
        %v584 = vpop.f32.mrb[0].mxu0
        %585 = vmatprep.mubr.f32.mxu0 0.0
        %586 = vmatmul.mubr.f32.gmra.mrb[0].mxu0 %v372
        %v587 = vpop.f32.mrb[0].mxu0
        %v588 = vadd.f32 0.0, %v587
        %v589 = vpop.f32.mrb[0].mxu0
        %590 = vmatprep.mubr.f32.mxu0 0.0
        %591 = vmatmul.mubr.f32.gmra.mrb[0].mxu0 %v375
        %v592 = vpop.f32.mrb[0].mxu0
        %v593 = vadd.f32 0.0, %v592
        %v594 = vpop.f32.mrb[0].mxu0
        %595 = vmatprep.mubr.f32.mxu0 0.0
        %596 = vmatmul.mubr.f32.gmra.mrb[0].mxu0 %v378
        %v597 = vpop.f32.mrb[0].mxu0
        %v598 = vadd.f32 0.0, %v597
        %v599 = vpop.f32.mrb[0].mxu0
        %600 = vmatprep.mubr.f32.mxu0 0.0
        %601 = vmatmul.mubr.f32.gmra.mrb[0].mxu0 %v381
        %v602 = vpop.f32.mrb[0].mxu0
        %v603 = vadd.f32 0.0, %v602
        %v604 = vpop.f32.mrb[0].mxu0
        %605 = vmatprep.mubr.f32.mxu0 0.0
        %606 = vmatmul.mubr.f32.gmra.mrb[0].mxu0 %v384
        %v607 = vpop.f32.mrb[0].mxu0
        %v608 = vadd.f32 0.0, %v607
        %v609 = vpop.f32.mrb[0].mxu0
        %610 = vmatprep.mubr.f32.mxu0 0.0
        %611 = vmatmul.mubr.f32.gmra.mrb[0].mxu0 %v387
        %v612 = vpop.f32.mrb[0].mxu0
        %v613 = vadd.f32 0.0, %v612
        %v614 = vpop.f32.mrb[0].mxu0
        %615 = vmatprep.mubr.f32.mxu0 0.0
        %616 = vmatmul.mubr.f32.gmra.mrb[0].mxu0 %v390
        %v617 = vpop.f32.mrb[0].mxu0
        %v618 = vadd.f32 0.0, %v617
        %v619 = vpop.f32.mrb[0].mxu0
        %620 = vdwg.mxu0
        %v622 = vsel %vm295, %v225, 0
        %v625 = vsel %vm295, %v226, 0
        %v628 = vsel %vm295, %v227, 0
        %v631 = vsel %vm295, %v228, 0
        %v634 = vsel %vm295, %v229, 0
        %v637 = vsel %vm295, %v230, 0
        %v640 = vsel %vm295, %v231, 0
        %v643 = vsel %vm295, %v232, 0
        %v646 = vsel %vm295, %v233, 0
        %v649 = vsel %vm295, %v234, 0
        %v652 = vsel %vm295, %v235, 0
        %v655 = vsel %vm295, %v236, 0
        %v658 = vsel %vm295, %v237, 0
        %v661 = vsel %vm295, %v238, 0
        %v664 = vsel %vm295, %v239, 0
        %v667 = vsel %vm295, %v240, 0
        %v670 = vsel %vm295, %v241, 0
        %v673 = vsel %vm295, %v242, 0
        %v676 = vsel %vm295, %v243, 0
        %v679 = vsel %vm295, %v244, 0
        %v682 = vsel %vm295, %v245, 0
        %v685 = vsel %vm295, %v246, 0
        %v688 = vsel %vm295, %v247, 0
        %v691 = vsel %vm295, %v248, 0
        %v694 = vsel %vm295, %v249, 0
        %v697 = vsel %vm295, %v250, 0
        %v700 = vsel %vm295, %v251, 0
        %v703 = vsel %vm295, %v252, 0
        %v706 = vsel %vm295, %v253, 0
        %v709 = vsel %vm295, %v254, 0
        %v712 = vsel %vm295, %v255, 0
        %v715 = vsel %vm295, %v256, 0
        %v718 = vsel %vm392, %v258, 0
        %720 = vmatprep.subr.mxu0 0.0
        %721 = vmatpush1.msra.mxu0 %v257
        %722 = vmatprep.subr.mxu0 0.0
        %723 = vmatpush1.msra.mxu0 %v718
        %724 = vmatprep.subr.mxu0 0.0
        %725 = vmatpush1.msra.mxu0 0.0
        %726 = vmatprep.subr.mxu0 0.0
        %727 = vmatpush1.msra.mxu0 0.0
        %728 = vmatprep.subr.mxu0 0.0
        %729 = vmatpush1.msra.mxu0 0.0
        %730 = vmatprep.subr.mxu0 0.0
        %731 = vmatpush1.msra.mxu0 0.0
        %732 = vmatprep.subr.mxu0 0.0
        %733 = vmatpush1.msra.mxu0 0.0
        %734 = vmatprep.subr.mxu0 0.0
        %735 = vmatpush1.msra.mxu0 0.0
        %736 = vmatprep.subr.mxu0 0.0
        %737 = vmatpush1.msra.mxu0 0.0
        %738 = vmatprep.subr.mxu0 0.0
        %739 = vmatpush1.msra.mxu0 0.0
        %740 = vmatprep.subr.mxu0 0.0
        %741 = vmatpush1.msra.mxu0 0.0
        %742 = vmatprep.subr.mxu0 0.0
        %743 = vmatpush1.msra.mxu0 0.0
        %744 = vmatprep.subr.mxu0 0.0
        %745 = vmatpush1.msra.mxu0 0.0
        %746 = vmatprep.subr.mxu0 0.0
        %747 = vmatpush1.msra.mxu0 0.0
        %748 = vmatprep.subr.mxu0 0.0
        %749 = vmatpush1.msra.mxu0 0.0
        %750 = vmatprep.subr.mxu0 0.0
        %751 = vmatpush1.msra.mxu0 0.0
        %752 = vmatprep.subr.mxu0 0.0
        %753 = vmatpush1.msra.mxu0 0.0
        %754 = vmatprep.subr.mxu0 0.0
        %755 = vmatpush1.msra.mxu0 0.0
        %756 = vmatprep.subr.mxu0 0.0
        %757 = vmatpush1.msra.mxu0 0.0
        %758 = vmatprep.subr.mxu0 0.0
        %759 = vmatpush1.msra.mxu0 0.0
        %760 = vmatprep.subr.mxu0 0.0
        %761 = vmatpush1.msra.mxu0 0.0
        %762 = vmatprep.subr.mxu0 0.0
        %763 = vmatpush1.msra.mxu0 0.0
        %764 = vmatprep.subr.mxu0 0.0
        %765 = vmatpush1.msra.mxu0 0.0
        %766 = vmatprep.subr.mxu0 0.0
        %767 = vmatpush1.msra.mxu0 0.0
        %768 = vmatprep.subr.mxu0 0.0
        %769 = vmatpush1.msra.mxu0 0.0
        %770 = vmatprep.subr.mxu0 0.0
        %771 = vmatpush1.msra.mxu0 0.0
        %772 = vmatprep.subr.mxu0 0.0
        %773 = vmatpush1.msra.mxu0 0.0
        %774 = vmatprep.subr.mxu0 0.0
        %775 = vmatpush1.msra.mxu0 0.0
        %776 = vmatprep.subr.mxu0 0.0
        %777 = vmatpush1.msra.mxu0 0.0
        %778 = vmatprep.subr.mxu0 0.0
        %779 = vmatpush1.msra.mxu0 0.0
        %780 = vmatprep.subr.mxu0 0.0
        %781 = vmatpush1.msra.mxu0 0.0
        %782 = vmatprep.subr.mxu0 0.0
        %783 = vmatpush1.msra.mxu0 0.0
        %784 = vmatprep.mubr.f32.mxu0 0.0
        %785 = vmatmul.mubr.f32.gmra.mrb[0].mxu0 %v622
        %v786 = vpop.f32.mrb[0].mxu0
        %v787 = vadd.f32 %v463, %v786
        %v788 = vpop.f32.mrb[0].mxu0
        %789 = vmatprep.mubr.f32.mxu0 0.0
        %790 = vmatmul.mubr.f32.gmra.mrb[0].mxu0 %v625
        %v791 = vpop.f32.mrb[0].mxu0
        %v792 = vadd.f32 %v468, %v791
        %v793 = vpop.f32.mrb[0].mxu0
        %794 = vmatprep.mubr.f32.mxu0 0.0
        %795 = vmatmul.mubr.f32.gmra.mrb[0].mxu0 %v628
        %v796 = vpop.f32.mrb[0].mxu0
        %v797 = vadd.f32 %v473, %v796
        %v798 = vpop.f32.mrb[0].mxu0
        %799 = vmatprep.mubr.f32.mxu0 0.0
        %800 = vmatmul.mubr.f32.gmra.mrb[0].mxu0 %v631
        %v801 = vpop.f32.mrb[0].mxu0
        %v802 = vadd.f32 %v478, %v801
        %v803 = vpop.f32.mrb[0].mxu0
        %804 = vmatprep.mubr.f32.mxu0 0.0
        %805 = vmatmul.mubr.f32.gmra.mrb[0].mxu0 %v634
        %v806 = vpop.f32.mrb[0].mxu0
        %v807 = vadd.f32 %v483, %v806
        %v808 = vpop.f32.mrb[0].mxu0
        %809 = vmatprep.mubr.f32.mxu0 0.0
        %810 = vmatmul.mubr.f32.gmra.mrb[0].mxu0 %v637
        %v811 = vpop.f32.mrb[0].mxu0
        %v812 = vadd.f32 %v488, %v811
        %v813 = vpop.f32.mrb[0].mxu0
        %814 = vmatprep.mubr.f32.mxu0 0.0
        %815 = vmatmul.mubr.f32.gmra.mrb[0].mxu0 %v640
        %v816 = vpop.f32.mrb[0].mxu0
        %v817 = vadd.f32 %v493, %v816
        %v818 = vpop.f32.mrb[0].mxu0
        %819 = vmatprep.mubr.f32.mxu0 0.0
        %820 = vmatmul.mubr.f32.gmra.mrb[0].mxu0 %v643
        %v821 = vpop.f32.mrb[0].mxu0
        %v822 = vadd.f32 %v498, %v821
        %v823 = vpop.f32.mrb[0].mxu0
        %824 = vmatprep.mubr.f32.mxu0 0.0
        %825 = vmatmul.mubr.f32.gmra.mrb[0].mxu0 %v646
        %v826 = vpop.f32.mrb[0].mxu0
        %v827 = vadd.f32 %v503, %v826
        %v828 = vpop.f32.mrb[0].mxu0
        %829 = vmatprep.mubr.f32.mxu0 0.0
        %830 = vmatmul.mubr.f32.gmra.mrb[0].mxu0 %v649
        %v831 = vpop.f32.mrb[0].mxu0
        %v832 = vadd.f32 %v508, %v831
        %v833 = vpop.f32.mrb[0].mxu0
        %834 = vmatprep.mubr.f32.mxu0 0.0
        %835 = vmatmul.mubr.f32.gmra.mrb[0].mxu0 %v652
        %v836 = vpop.f32.mrb[0].mxu0
        %v837 = vadd.f32 %v513, %v836
        %v838 = vpop.f32.mrb[0].mxu0
        %839 = vmatprep.mubr.f32.mxu0 0.0
        %840 = vmatmul.mubr.f32.gmra.mrb[0].mxu0 %v655
        %v841 = vpop.f32.mrb[0].mxu0
        %v842 = vadd.f32 %v518, %v841
        %v843 = vpop.f32.mrb[0].mxu0
        %844 = vmatprep.mubr.f32.mxu0 0.0
        %845 = vmatmul.mubr.f32.gmra.mrb[0].mxu0 %v658
        %v846 = vpop.f32.mrb[0].mxu0
        %v847 = vadd.f32 %v523, %v846
        %v848 = vpop.f32.mrb[0].mxu0
        %849 = vmatprep.mubr.f32.mxu0 0.0
        %850 = vmatmul.mubr.f32.gmra.mrb[0].mxu0 %v661
        %v851 = vpop.f32.mrb[0].mxu0
        %v852 = vadd.f32 %v528, %v851
        %v853 = vpop.f32.mrb[0].mxu0
        %854 = vmatprep.mubr.f32.mxu0 0.0
        %855 = vmatmul.mubr.f32.gmra.mrb[0].mxu0 %v664
        %v856 = vpop.f32.mrb[0].mxu0
        %v857 = vadd.f32 %v533, %v856
        %v858 = vpop.f32.mrb[0].mxu0
        %859 = vmatprep.mubr.f32.mxu0 0.0
        %860 = vmatmul.mubr.f32.gmra.mrb[0].mxu0 %v667
        %v861 = vpop.f32.mrb[0].mxu0
        %v862 = vadd.f32 %v538, %v861
        %v863 = vpop.f32.mrb[0].mxu0
        %864 = vmatprep.mubr.f32.mxu0 0.0
        %865 = vmatmul.mubr.f32.gmra.mrb[0].mxu0 %v670
        %v866 = vpop.f32.mrb[0].mxu0
        %v867 = vadd.f32 %v543, %v866
        %v868 = vpop.f32.mrb[0].mxu0
        %869 = vmatprep.mubr.f32.mxu0 0.0
        %870 = vmatmul.mubr.f32.gmra.mrb[0].mxu0 %v673
        %v871 = vpop.f32.mrb[0].mxu0
        %v872 = vadd.f32 %v548, %v871
        %v873 = vpop.f32.mrb[0].mxu0
        %874 = vmatprep.mubr.f32.mxu0 0.0
        %875 = vmatmul.mubr.f32.gmra.mrb[0].mxu0 %v676
        %v876 = vpop.f32.mrb[0].mxu0
        %v877 = vadd.f32 %v553, %v876
        %v878 = vpop.f32.mrb[0].mxu0
        %879 = vmatprep.mubr.f32.mxu0 0.0
        %880 = vmatmul.mubr.f32.gmra.mrb[0].mxu0 %v679
        %v881 = vpop.f32.mrb[0].mxu0
        %v882 = vadd.f32 %v558, %v881
        %v883 = vpop.f32.mrb[0].mxu0
        %884 = vmatprep.mubr.f32.mxu0 0.0
        %885 = vmatmul.mubr.f32.gmra.mrb[0].mxu0 %v682
        %v886 = vpop.f32.mrb[0].mxu0
        %v887 = vadd.f32 %v563, %v886
        %v888 = vpop.f32.mrb[0].mxu0
        %889 = vmatprep.mubr.f32.mxu0 0.0
        %890 = vmatmul.mubr.f32.gmra.mrb[0].mxu0 %v685
        %v891 = vpop.f32.mrb[0].mxu0
        %v892 = vadd.f32 %v568, %v891
        %v893 = vpop.f32.mrb[0].mxu0
        %894 = vmatprep.mubr.f32.mxu0 0.0
        %895 = vmatmul.mubr.f32.gmra.mrb[0].mxu0 %v688
        %v896 = vpop.f32.mrb[0].mxu0
        %v897 = vadd.f32 %v573, %v896
        %v898 = vpop.f32.mrb[0].mxu0
        %899 = vmatprep.mubr.f32.mxu0 0.0
        %900 = vmatmul.mubr.f32.gmra.mrb[0].mxu0 %v691
        %v901 = vpop.f32.mrb[0].mxu0
        %v902 = vadd.f32 %v578, %v901
        %v903 = vpop.f32.mrb[0].mxu0
        %904 = vmatprep.mubr.f32.mxu0 0.0
        %905 = vmatmul.mubr.f32.gmra.mrb[0].mxu0 %v694
        %v906 = vpop.f32.mrb[0].mxu0
        %v907 = vadd.f32 %v583, %v906
        %v908 = vpop.f32.mrb[0].mxu0
        %909 = vmatprep.mubr.f32.mxu0 0.0
        %910 = vmatmul.mubr.f32.gmra.mrb[0].mxu0 %v697
        %v911 = vpop.f32.mrb[0].mxu0
        %v912 = vadd.f32 %v588, %v911
        %v913 = vpop.f32.mrb[0].mxu0
        %914 = vmatprep.mubr.f32.mxu0 0.0
        %915 = vmatmul.mubr.f32.gmra.mrb[0].mxu0 %v700
        %v916 = vpop.f32.mrb[0].mxu0
        %v917 = vadd.f32 %v593, %v916
        %v918 = vpop.f32.mrb[0].mxu0
        %919 = vmatprep.mubr.f32.mxu0 0.0
        %920 = vmatmul.mubr.f32.gmra.mrb[0].mxu0 %v703
        %v921 = vpop.f32.mrb[0].mxu0
        %v922 = vadd.f32 %v598, %v921
        %v923 = vpop.f32.mrb[0].mxu0
        %924 = vmatprep.mubr.f32.mxu0 0.0
        %925 = vmatmul.mubr.f32.gmra.mrb[0].mxu0 %v706
        %v926 = vpop.f32.mrb[0].mxu0
        %v927 = vadd.f32 %v603, %v926
        %v928 = vpop.f32.mrb[0].mxu0
        %929 = vmatprep.mubr.f32.mxu0 0.0
        %930 = vmatmul.mubr.f32.gmra.mrb[0].mxu0 %v709
        %v931 = vpop.f32.mrb[0].mxu0
        %v932 = vadd.f32 %v608, %v931
        %v933 = vpop.f32.mrb[0].mxu0
        %934 = vmatprep.mubr.f32.mxu0 0.0
        %935 = vmatmul.mubr.f32.gmra.mrb[0].mxu0 %v712
        %v936 = vpop.f32.mrb[0].mxu0
        %v937 = vadd.f32 %v613, %v936
        %v938 = vpop.f32.mrb[0].mxu0
        %939 = vmatprep.mubr.f32.mxu0 0.0
        %940 = vmatmul.mubr.f32.gmra.mrb[0].mxu0 %v715
        %v941 = vpop.f32.mrb[0].mxu0
        %v942 = vadd.f32 %v618, %v941
        %v943 = vpop.f32.mrb[0].mxu0
        %944 = vdwg.mxu0
        %s945 = scalar_lea.vmem %s224, 32
        %v946 = vld [vmem:[%s945] sm:$0xff]
        %v947 = vld [vmem:[%s945 + $0x8] sm:$0xff]
        %v948 = vld [vmem:[%s945 + $0x10] sm:$0xff]
        %v949 = vld [vmem:[%s945 + $0x18] sm:$0xff]
        %v950 = vld [vmem:[%s945 + $0x20] sm:$0xff]
        %v951 = vld [vmem:[%s945 + $0x28] sm:$0xff]
        %v952 = vld [vmem:[%s945 + $0x30] sm:$0xff]
        %v953 = vld [vmem:[%s945 + $0x38] sm:$0xff]
        %v954 = vld [vmem:[%s945 + $0x40] sm:$0xff]
        %v955 = vld [vmem:[%s945 + $0x48] sm:$0xff]
        %v956 = vld [vmem:[%s945 + $0x50] sm:$0xff]
        %v957 = vld [vmem:[%s945 + $0x58] sm:$0xff]
        %v958 = vld [vmem:[%s945 + $0x60] sm:$0xff]
        %v959 = vld [vmem:[%s945 + $0x68] sm:$0xff]
        %v960 = vld [vmem:[%s945 + $0x70] sm:$0xff]
        %v961 = vld [vmem:[%s945 + $0x78] sm:$0xff]
        %v962 = vld [vmem:[%s945 + $0x80] sm:$0xff]
        %v963 = vld [vmem:[%s945 + $0x88] sm:$0xff]
        %v964 = vld [vmem:[%s945 + $0x90] sm:$0xff]
        %v965 = vld [vmem:[%s945 + $0x98] sm:$0xff]
        %v966 = vld [vmem:[%s945 + $0xa0] sm:$0xff]
        %v967 = vld [vmem:[%s945 + $0xa8] sm:$0xff]
        %v968 = vld [vmem:[%s945 + $0xb0] sm:$0xff]
        %v969 = vld [vmem:[%s945 + $0xb8] sm:$0xff]
        %v970 = vld [vmem:[%s945 + $0xc0] sm:$0xff]
        %v971 = vld [vmem:[%s945 + $0xc8] sm:$0xff]
        %v972 = vld [vmem:[%s945 + $0xd0] sm:$0xff]
        %v973 = vld [vmem:[%s945 + $0xd8] sm:$0xff]
        %v974 = vld [vmem:[%s945 + $0xe0] sm:$0xff]
        %v975 = vld [vmem:[%s945 + $0xe8] sm:$0xff]
        %v976 = vld [vmem:[%s945 + $0xf0] sm:$0xff]
        %v977 = vld [vmem:[%s945 + $0xf8] sm:$0xff]
        %s978 = scalar_lea.vmem %s1, 32
        %v979 = vld [vmem:[%s978] sm:$0xff]
        %v980 = vld [vmem:[%s978 + $0x8] sm:$0xf]
        %v982 = vsel %vm295, %v946, 0
        %v985 = vsel %vm295, %v947, 0
        %v988 = vsel %vm295, %v948, 0
        %v991 = vsel %vm295, %v949, 0
        %v994 = vsel %vm295, %v950, 0
        %v997 = vsel %vm295, %v951, 0
        %v1000 = vsel %vm295, %v952, 0
        %v1003 = vsel %vm295, %v953, 0
        %v1006 = vsel %vm295, %v954, 0
        %v1009 = vsel %vm295, %v955, 0
        %v1012 = vsel %vm295, %v956, 0
        %v1015 = vsel %vm295, %v957, 0
        %v1018 = vsel %vm295, %v958, 0
        %v1021 = vsel %vm295, %v959, 0
        %v1024 = vsel %vm295, %v960, 0
        %v1027 = vsel %vm295, %v961, 0
        %v1030 = vsel %vm295, %v962, 0
        %v1033 = vsel %vm295, %v963, 0
        %v1036 = vsel %vm295, %v964, 0
        %v1039 = vsel %vm295, %v965, 0
        %v1042 = vsel %vm295, %v966, 0
        %v1045 = vsel %vm295, %v967, 0
        %v1048 = vsel %vm295, %v968, 0
        %v1051 = vsel %vm295, %v969, 0
        %v1054 = vsel %vm295, %v970, 0
        %v1057 = vsel %vm295, %v971, 0
        %v1060 = vsel %vm295, %v972, 0
        %v1063 = vsel %vm295, %v973, 0
        %v1066 = vsel %vm295, %v974, 0
        %v1069 = vsel %vm295, %v975, 0
        %v1072 = vsel %vm295, %v976, 0
        %v1075 = vsel %vm295, %v977, 0
        %v1078 = vsel %vm392, %v980, 0
        %1080 = vmatprep.subr.mxu0 0.0
        %1081 = vmatpush1.msra.mxu0 %v979
        %1082 = vmatprep.subr.mxu0 0.0
        %1083 = vmatpush1.msra.mxu0 %v1078
        %1084 = vmatprep.subr.mxu0 0.0
        %1085 = vmatpush1.msra.mxu0 0.0
        %1086 = vmatprep.subr.mxu0 0.0
        %1087 = vmatpush1.msra.mxu0 0.0
        %1088 = vmatprep.subr.mxu0 0.0
        %1089 = vmatpush1.msra.mxu0 0.0
        %1090 = vmatprep.subr.mxu0 0.0
        %1091 = vmatpush1.msra.mxu0 0.0
        %1092 = vmatprep.subr.mxu0 0.0
        %1093 = vmatpush1.msra.mxu0 0.0
        %1094 = vmatprep.subr.mxu0 0.0
        %1095 = vmatpush1.msra.mxu0 0.0
        %1096 = vmatprep.subr.mxu0 0.0
        %1097 = vmatpush1.msra.mxu0 0.0
        %1098 = vmatprep.subr.mxu0 0.0
        %1099 = vmatpush1.msra.mxu0 0.0
        %1100 = vmatprep.subr.mxu0 0.0
        %1101 = vmatpush1.msra.mxu0 0.0
        %1102 = vmatprep.subr.mxu0 0.0
        %1103 = vmatpush1.msra.mxu0 0.0
        %1104 = vmatprep.subr.mxu0 0.0
        %1105 = vmatpush1.msra.mxu0 0.0
        %1106 = vmatprep.subr.mxu0 0.0
        %1107 = vmatpush1.msra.mxu0 0.0
        %1108 = vmatprep.subr.mxu0 0.0
        %1109 = vmatpush1.msra.mxu0 0.0
        %1110 = vmatprep.subr.mxu0 0.0
        %1111 = vmatpush1.msra.mxu0 0.0
        %1112 = vmatprep.subr.mxu0 0.0
        %1113 = vmatpush1.msra.mxu0 0.0
        %1114 = vmatprep.subr.mxu0 0.0
        %1115 = vmatpush1.msra.mxu0 0.0
        %1116 = vmatprep.subr.mxu0 0.0
        %1117 = vmatpush1.msra.mxu0 0.0
        %1118 = vmatprep.subr.mxu0 0.0
        %1119 = vmatpush1.msra.mxu0 0.0
        %1120 = vmatprep.subr.mxu0 0.0
        %1121 = vmatpush1.msra.mxu0 0.0
        %1122 = vmatprep.subr.mxu0 0.0
        %1123 = vmatpush1.msra.mxu0 0.0
        %1124 = vmatprep.subr.mxu0 0.0
        %1125 = vmatpush1.msra.mxu0 0.0
        %1126 = vmatprep.subr.mxu0 0.0
        %1127 = vmatpush1.msra.mxu0 0.0
        %1128 = vmatprep.subr.mxu0 0.0
        %1129 = vmatpush1.msra.mxu0 0.0
        %1130 = vmatprep.subr.mxu0 0.0
        %1131 = vmatpush1.msra.mxu0 0.0
        %1132 = vmatprep.subr.mxu0 0.0
        %1133 = vmatpush1.msra.mxu0 0.0
        %1134 = vmatprep.subr.mxu0 0.0
        %1135 = vmatpush1.msra.mxu0 0.0
        %1136 = vmatprep.subr.mxu0 0.0
        %1137 = vmatpush1.msra.mxu0 0.0
        %1138 = vmatprep.subr.mxu0 0.0
        %1139 = vmatpush1.msra.mxu0 0.0
        %1140 = vmatprep.subr.mxu0 0.0
        %1141 = vmatpush1.msra.mxu0 0.0
        %1142 = vmatprep.subr.mxu0 0.0
        %1143 = vmatpush1.msra.mxu0 0.0
        %1144 = vmatprep.mubr.f32.mxu0 0.0
        %1145 = vmatmul.mubr.f32.gmra.mrb[0].mxu0 %v982
        %v1146 = vpop.f32.mrb[0].mxu0
        %v1147 = vadd.f32 0.0, %v1146
        %v1148 = vpop.f32.mrb[0].mxu0
        %1149 = vmatprep.mubr.f32.mxu0 0.0
        %1150 = vmatmul.mubr.f32.gmra.mrb[0].mxu0 %v985
        %v1151 = vpop.f32.mrb[0].mxu0
        %v1152 = vadd.f32 0.0, %v1151
        %v1153 = vpop.f32.mrb[0].mxu0
        %1154 = vmatprep.mubr.f32.mxu0 0.0
        %1155 = vmatmul.mubr.f32.gmra.mrb[0].mxu0 %v988
        %v1156 = vpop.f32.mrb[0].mxu0
        %v1157 = vadd.f32 0.0, %v1156
        %v1158 = vpop.f32.mrb[0].mxu0
        %1159 = vmatprep.mubr.f32.mxu0 0.0
        %1160 = vmatmul.mubr.f32.gmra.mrb[0].mxu0 %v991
        %v1161 = vpop.f32.mrb[0].mxu0
        %v1162 = vadd.f32 0.0, %v1161
        %v1163 = vpop.f32.mrb[0].mxu0
        %1164 = vmatprep.mubr.f32.mxu0 0.0
        %1165 = vmatmul.mubr.f32.gmra.mrb[0].mxu0 %v994
        %v1166 = vpop.f32.mrb[0].mxu0
        %v1167 = vadd.f32 0.0, %v1166
        %v1168 = vpop.f32.mrb[0].mxu0
        %1169 = vmatprep.mubr.f32.mxu0 0.0
        %1170 = vmatmul.mubr.f32.gmra.mrb[0].mxu0 %v997
        %v1171 = vpop.f32.mrb[0].mxu0
        %v1172 = vadd.f32 0.0, %v1171
        %v1173 = vpop.f32.mrb[0].mxu0
        %1174 = vmatprep.mubr.f32.mxu0 0.0
        %1175 = vmatmul.mubr.f32.gmra.mrb[0].mxu0 %v1000
        %v1176 = vpop.f32.mrb[0].mxu0
        %v1177 = vadd.f32 0.0, %v1176
        %v1178 = vpop.f32.mrb[0].mxu0
        %1179 = vmatprep.mubr.f32.mxu0 0.0
        %1180 = vmatmul.mubr.f32.gmra.mrb[0].mxu0 %v1003
        %v1181 = vpop.f32.mrb[0].mxu0
        %v1182 = vadd.f32 0.0, %v1181
        %v1183 = vpop.f32.mrb[0].mxu0
        %1184 = vmatprep.mubr.f32.mxu0 0.0
        %1185 = vmatmul.mubr.f32.gmra.mrb[0].mxu0 %v1006
        %v1186 = vpop.f32.mrb[0].mxu0
        %v1187 = vadd.f32 0.0, %v1186
        %v1188 = vpop.f32.mrb[0].mxu0
        %1189 = vmatprep.mubr.f32.mxu0 0.0
        %1190 = vmatmul.mubr.f32.gmra.mrb[0].mxu0 %v1009
        %v1191 = vpop.f32.mrb[0].mxu0
        %v1192 = vadd.f32 0.0, %v1191
        %v1193 = vpop.f32.mrb[0].mxu0
        %1194 = vmatprep.mubr.f32.mxu0 0.0
        %1195 = vmatmul.mubr.f32.gmra.mrb[0].mxu0 %v1012
        %v1196 = vpop.f32.mrb[0].mxu0
        %v1197 = vadd.f32 0.0, %v1196
        %v1198 = vpop.f32.mrb[0].mxu0
        %1199 = vmatprep.mubr.f32.mxu0 0.0
        %1200 = vmatmul.mubr.f32.gmra.mrb[0].mxu0 %v1015
        %v1201 = vpop.f32.mrb[0].mxu0
        %v1202 = vadd.f32 0.0, %v1201
        %v1203 = vpop.f32.mrb[0].mxu0
        %1204 = vmatprep.mubr.f32.mxu0 0.0
        %1205 = vmatmul.mubr.f32.gmra.mrb[0].mxu0 %v1018
        %v1206 = vpop.f32.mrb[0].mxu0
        %v1207 = vadd.f32 0.0, %v1206
        %v1208 = vpop.f32.mrb[0].mxu0
        %1209 = vmatprep.mubr.f32.mxu0 0.0
        %1210 = vmatmul.mubr.f32.gmra.mrb[0].mxu0 %v1021
        %v1211 = vpop.f32.mrb[0].mxu0
        %v1212 = vadd.f32 0.0, %v1211
        %v1213 = vpop.f32.mrb[0].mxu0
        %1214 = vmatprep.mubr.f32.mxu0 0.0
        %1215 = vmatmul.mubr.f32.gmra.mrb[0].mxu0 %v1024
        %v1216 = vpop.f32.mrb[0].mxu0
        %v1217 = vadd.f32 0.0, %v1216
        %v1218 = vpop.f32.mrb[0].mxu0
        %1219 = vmatprep.mubr.f32.mxu0 0.0
        %1220 = vmatmul.mubr.f32.gmra.mrb[0].mxu0 %v1027
        %v1221 = vpop.f32.mrb[0].mxu0
        %v1222 = vadd.f32 0.0, %v1221
        %v1223 = vpop.f32.mrb[0].mxu0
        %1224 = vmatprep.mubr.f32.mxu0 0.0
        %1225 = vmatmul.mubr.f32.gmra.mrb[0].mxu0 %v1030
        %v1226 = vpop.f32.mrb[0].mxu0
        %v1227 = vadd.f32 0.0, %v1226
        %v1228 = vpop.f32.mrb[0].mxu0
        %1229 = vmatprep.mubr.f32.mxu0 0.0
        %1230 = vmatmul.mubr.f32.gmra.mrb[0].mxu0 %v1033
        %v1231 = vpop.f32.mrb[0].mxu0
        %v1232 = vadd.f32 0.0, %v1231
        %v1233 = vpop.f32.mrb[0].mxu0
        %1234 = vmatprep.mubr.f32.mxu0 0.0
        %1235 = vmatmul.mubr.f32.gmra.mrb[0].mxu0 %v1036
        %v1236 = vpop.f32.mrb[0].mxu0
        %v1237 = vadd.f32 0.0, %v1236
        %v1238 = vpop.f32.mrb[0].mxu0
        %1239 = vmatprep.mubr.f32.mxu0 0.0
        %1240 = vmatmul.mubr.f32.gmra.mrb[0].mxu0 %v1039
        %v1241 = vpop.f32.mrb[0].mxu0
        %v1242 = vadd.f32 0.0, %v1241
        %v1243 = vpop.f32.mrb[0].mxu0
        %1244 = vmatprep.mubr.f32.mxu0 0.0
        %1245 = vmatmul.mubr.f32.gmra.mrb[0].mxu0 %v1042
        %v1246 = vpop.f32.mrb[0].mxu0
        %v1247 = vadd.f32 0.0, %v1246
        %v1248 = vpop.f32.mrb[0].mxu0
        %1249 = vmatprep.mubr.f32.mxu0 0.0
        %1250 = vmatmul.mubr.f32.gmra.mrb[0].mxu0 %v1045
        %v1251 = vpop.f32.mrb[0].mxu0
        %v1252 = vadd.f32 0.0, %v1251
        %v1253 = vpop.f32.mrb[0].mxu0
        %1254 = vmatprep.mubr.f32.mxu0 0.0
        %1255 = vmatmul.mubr.f32.gmra.mrb[0].mxu0 %v1048
        %v1256 = vpop.f32.mrb[0].mxu0
        %v1257 = vadd.f32 0.0, %v1256
        %v1258 = vpop.f32.mrb[0].mxu0
        %1259 = vmatprep.mubr.f32.mxu0 0.0
        %1260 = vmatmul.mubr.f32.gmra.mrb[0].mxu0 %v1051
        %v1261 = vpop.f32.mrb[0].mxu0
        %v1262 = vadd.f32 0.0, %v1261
        %v1263 = vpop.f32.mrb[0].mxu0
        %1264 = vmatprep.mubr.f32.mxu0 0.0
        %1265 = vmatmul.mubr.f32.gmra.mrb[0].mxu0 %v1054
        %v1266 = vpop.f32.mrb[0].mxu0
        %v1267 = vadd.f32 0.0, %v1266
        %v1268 = vpop.f32.mrb[0].mxu0
        %1269 = vmatprep.mubr.f32.mxu0 0.0
        %1270 = vmatmul.mubr.f32.gmra.mrb[0].mxu0 %v1057
        %v1271 = vpop.f32.mrb[0].mxu0
        %v1272 = vadd.f32 0.0, %v1271
        %v1273 = vpop.f32.mrb[0].mxu0
        %1274 = vmatprep.mubr.f32.mxu0 0.0
        %1275 = vmatmul.mubr.f32.gmra.mrb[0].mxu0 %v1060
        %v1276 = vpop.f32.mrb[0].mxu0
        %v1277 = vadd.f32 0.0, %v1276
        %v1278 = vpop.f32.mrb[0].mxu0
        %1279 = vmatprep.mubr.f32.mxu0 0.0
        %1280 = vmatmul.mubr.f32.gmra.mrb[0].mxu0 %v1063
        %v1281 = vpop.f32.mrb[0].mxu0
        %v1282 = vadd.f32 0.0, %v1281
        %v1283 = vpop.f32.mrb[0].mxu0
        %1284 = vmatprep.mubr.f32.mxu0 0.0
        %1285 = vmatmul.mubr.f32.gmra.mrb[0].mxu0 %v1066
        %v1286 = vpop.f32.mrb[0].mxu0
        %v1287 = vadd.f32 0.0, %v1286
        %v1288 = vpop.f32.mrb[0].mxu0
        %1289 = vmatprep.mubr.f32.mxu0 0.0
        %1290 = vmatmul.mubr.f32.gmra.mrb[0].mxu0 %v1069
        %v1291 = vpop.f32.mrb[0].mxu0
        %v1292 = vadd.f32 0.0, %v1291
        %v1293 = vpop.f32.mrb[0].mxu0
        %1294 = vmatprep.mubr.f32.mxu0 0.0
        %1295 = vmatmul.mubr.f32.gmra.mrb[0].mxu0 %v1072
        %v1296 = vpop.f32.mrb[0].mxu0
        %v1297 = vadd.f32 0.0, %v1296
        %v1298 = vpop.f32.mrb[0].mxu0
        %1299 = vmatprep.mubr.f32.mxu0 0.0
        %1300 = vmatmul.mubr.f32.gmra.mrb[0].mxu0 %v1075
        %v1301 = vpop.f32.mrb[0].mxu0
        %v1302 = vadd.f32 0.0, %v1301
        %v1303 = vpop.f32.mrb[0].mxu0
        %1304 = vdwg.mxu0
        %v1305 = vadd.f32 %v787, %v1147
        %v1306 = vadd.f32 %v792, %v1152
        %v1307 = vadd.f32 %v797, %v1157
        %v1308 = vadd.f32 %v802, %v1162
        %v1309 = vadd.f32 %v807, %v1167
        %v1310 = vadd.f32 %v812, %v1172
        %v1311 = vadd.f32 %v817, %v1177
        %v1312 = vadd.f32 %v822, %v1182
        %v1313 = vadd.f32 %v827, %v1187
        %v1314 = vadd.f32 %v832, %v1192
        %v1315 = vadd.f32 %v837, %v1197
        %v1316 = vadd.f32 %v842, %v1202
        %v1317 = vadd.f32 %v847, %v1207
        %v1318 = vadd.f32 %v852, %v1212
        %v1319 = vadd.f32 %v857, %v1217
        %v1320 = vadd.f32 %v862, %v1222
        %v1321 = vadd.f32 %v867, %v1227
        %v1322 = vadd.f32 %v872, %v1232
        %v1323 = vadd.f32 %v877, %v1237
        %v1324 = vadd.f32 %v882, %v1242
        %v1325 = vadd.f32 %v887, %v1247
        %v1326 = vadd.f32 %v892, %v1252
        %v1327 = vadd.f32 %v897, %v1257
        %v1328 = vadd.f32 %v902, %v1262
        %v1329 = vadd.f32 %v907, %v1267
        %v1330 = vadd.f32 %v912, %v1272
        %v1331 = vadd.f32 %v917, %v1277
        %v1332 = vadd.f32 %v922, %v1282
        %v1333 = vadd.f32 %v927, %v1287
        %v1334 = vadd.f32 %v932, %v1292
        %v1335 = vadd.f32 %v937, %v1297
        %v1336 = vadd.f32 %v942, %v1302
        %v1337 = vld [vmem:[%s2] sm:$0x1]
        %v1339 = vlaneseq
        %v1340 = vshrl.u32 %v1339, 7
        %v1341 = vsub.s32 0, %v1340
        %v1342 = vrot.slane %v1337, %v1341
        %v1344 = vadd.f32 %v1305, %v1342
        %v1345 = vadd.f32 %v1306, %v1342
        %v1346 = vadd.f32 %v1307, %v1342
        %v1347 = vadd.f32 %v1308, %v1342
        %v1348 = vadd.f32 %v1309, %v1342
        %v1349 = vadd.f32 %v1310, %v1342
        %v1350 = vadd.f32 %v1311, %v1342
        %v1351 = vadd.f32 %v1312, %v1342
        %v1352 = vadd.f32 %v1313, %v1342
        %v1353 = vadd.f32 %v1314, %v1342
        %v1354 = vadd.f32 %v1315, %v1342
        %v1355 = vadd.f32 %v1316, %v1342
        %v1356 = vadd.f32 %v1317, %v1342
        %v1357 = vadd.f32 %v1318, %v1342
        %v1358 = vadd.f32 %v1319, %v1342
        %v1359 = vadd.f32 %v1320, %v1342
        %v1360 = vadd.f32 %v1321, %v1342
        %v1361 = vadd.f32 %v1322, %v1342
        %v1362 = vadd.f32 %v1323, %v1342
        %v1363 = vadd.f32 %v1324, %v1342
        %v1364 = vadd.f32 %v1325, %v1342
        %v1365 = vadd.f32 %v1326, %v1342
        %v1366 = vadd.f32 %v1327, %v1342
        %v1367 = vadd.f32 %v1328, %v1342
        %v1368 = vadd.f32 %v1329, %v1342
        %v1369 = vadd.f32 %v1330, %v1342
        %v1370 = vadd.f32 %v1331, %v1342
        %v1371 = vadd.f32 %v1332, %v1342
        %v1372 = vadd.f32 %v1333, %v1342
        %v1373 = vadd.f32 %v1334, %v1342
        %v1374 = vadd.f32 %v1335, %v1342
        %v1375 = vadd.f32 %v1336, %v1342
        %s1376 = sld [smem:[#allocation2]]
        %vm1377 = vcmp.ge.f32.partialorder %v1344, 0.0
        %vm1378 = vcmp.ge.f32.partialorder %v1345, 0.0
        %vm1379 = vcmp.ge.f32.partialorder %v1346, 0.0
        %vm1380 = vcmp.ge.f32.partialorder %v1347, 0.0
        %vm1381 = vcmp.ge.f32.partialorder %v1348, 0.0
        %vm1382 = vcmp.ge.f32.partialorder %v1349, 0.0
        %vm1383 = vcmp.ge.f32.partialorder %v1350, 0.0
        %vm1384 = vcmp.ge.f32.partialorder %v1351, 0.0
        %vm1385 = vcmp.ge.f32.partialorder %v1352, 0.0
        %vm1386 = vcmp.ge.f32.partialorder %v1353, 0.0
        %vm1387 = vcmp.ge.f32.partialorder %v1354, 0.0
        %vm1388 = vcmp.ge.f32.partialorder %v1355, 0.0
        %vm1389 = vcmp.ge.f32.partialorder %v1356, 0.0
        %vm1390 = vcmp.ge.f32.partialorder %v1357, 0.0
        %vm1391 = vcmp.ge.f32.partialorder %v1358, 0.0
        %vm1392 = vcmp.ge.f32.partialorder %v1359, 0.0
        %vm1393 = vcmp.ge.f32.partialorder %v1360, 0.0
        %vm1394 = vcmp.ge.f32.partialorder %v1361, 0.0
        %vm1395 = vcmp.ge.f32.partialorder %v1362, 0.0
        %vm1396 = vcmp.ge.f32.partialorder %v1363, 0.0
        %vm1397 = vcmp.ge.f32.partialorder %v1364, 0.0
        %vm1398 = vcmp.ge.f32.partialorder %v1365, 0.0
        %vm1399 = vcmp.ge.f32.partialorder %v1366, 0.0
        %vm1400 = vcmp.ge.f32.partialorder %v1367, 0.0
        %vm1401 = vcmp.ge.f32.partialorder %v1368, 0.0
        %vm1402 = vcmp.ge.f32.partialorder %v1369, 0.0
        %vm1403 = vcmp.ge.f32.partialorder %v1370, 0.0
        %vm1404 = vcmp.ge.f32.partialorder %v1371, 0.0
        %vm1405 = vcmp.ge.f32.partialorder %v1372, 0.0
        %vm1406 = vcmp.ge.f32.partialorder %v1373, 0.0
        %vm1407 = vcmp.ge.f32.partialorder %v1374, 0.0
        %vm1408 = vcmp.ge.f32.partialorder %v1375, 0.0
        %v1409 = vstv %s1376
        %v1410 = vmul.f32 %v1409, %v1344
        %v1411 = vmul.f32 %v1409, %v1345
        %v1412 = vmul.f32 %v1409, %v1346
        %v1413 = vmul.f32 %v1409, %v1347
        %v1414 = vmul.f32 %v1409, %v1348
        %v1415 = vmul.f32 %v1409, %v1349
        %v1416 = vmul.f32 %v1409, %v1350
        %v1417 = vmul.f32 %v1409, %v1351
        %v1418 = vmul.f32 %v1409, %v1352
        %v1419 = vmul.f32 %v1409, %v1353
        %v1420 = vmul.f32 %v1409, %v1354
        %v1421 = vmul.f32 %v1409, %v1355
        %v1422 = vmul.f32 %v1409, %v1356
        %v1423 = vmul.f32 %v1409, %v1357
        %v1424 = vmul.f32 %v1409, %v1358
        %v1425 = vmul.f32 %v1409, %v1359
        %v1426 = vmul.f32 %v1409, %v1360
        %v1427 = vmul.f32 %v1409, %v1361
        %v1428 = vmul.f32 %v1409, %v1362
        %v1429 = vmul.f32 %v1409, %v1363
        %v1430 = vmul.f32 %v1409, %v1364
        %v1431 = vmul.f32 %v1409, %v1365
        %v1432 = vmul.f32 %v1409, %v1366
        %v1433 = vmul.f32 %v1409, %v1367
        %v1434 = vmul.f32 %v1409, %v1368
        %v1435 = vmul.f32 %v1409, %v1369
        %v1436 = vmul.f32 %v1409, %v1370
        %v1437 = vmul.f32 %v1409, %v1371
        %v1438 = vmul.f32 %v1409, %v1372
        %v1439 = vmul.f32 %v1409, %v1373
        %v1440 = vmul.f32 %v1409, %v1374
        %v1441 = vmul.f32 %v1409, %v1375
        %v1442 = vsel %vm1377, %v1344, %v1410
        %v1443 = vsel %vm1378, %v1345, %v1411
        %v1444 = vsel %vm1379, %v1346, %v1412
        %v1445 = vsel %vm1380, %v1347, %v1413
        %v1446 = vsel %vm1381, %v1348, %v1414
        %v1447 = vsel %vm1382, %v1349, %v1415
        %v1448 = vsel %vm1383, %v1350, %v1416
        %v1449 = vsel %vm1384, %v1351, %v1417
        %v1450 = vsel %vm1385, %v1352, %v1418
        %v1451 = vsel %vm1386, %v1353, %v1419
        %v1452 = vsel %vm1387, %v1354, %v1420
        %v1453 = vsel %vm1388, %v1355, %v1421
        %v1454 = vsel %vm1389, %v1356, %v1422
        %v1455 = vsel %vm1390, %v1357, %v1423
        %v1456 = vsel %vm1391, %v1358, %v1424
        %v1457 = vsel %vm1392, %v1359, %v1425
        %v1458 = vsel %vm1393, %v1360, %v1426
        %v1459 = vsel %vm1394, %v1361, %v1427
        %v1460 = vsel %vm1395, %v1362, %v1428
        %v1461 = vsel %vm1396, %v1363, %v1429
        %v1462 = vsel %vm1397, %v1364, %v1430
        %v1463 = vsel %vm1398, %v1365, %v1431
        %v1464 = vsel %vm1399, %v1366, %v1432
        %v1465 = vsel %vm1400, %v1367, %v1433
        %v1466 = vsel %vm1401, %v1368, %v1434
        %v1467 = vsel %vm1402, %v1369, %v1435
        %v1468 = vsel %vm1403, %v1370, %v1436
        %v1469 = vsel %vm1404, %v1371, %v1437
        %v1470 = vsel %vm1405, %v1372, %v1438
        %v1471 = vsel %vm1406, %v1373, %v1439
        %v1472 = vsel %vm1407, %v1374, %v1440
        %v1473 = vsel %vm1408, %v1375, %v1441
        %vm1474 = vcmask 130048
        %1475 = vst.msk [vmem:[%s215] sm:$0xff] %vm1474, %v1442
        %1476 = vst.msk [vmem:[%s215 + $0x8] sm:$0xff] %vm1474, %v1443
        %1477 = vst.msk [vmem:[%s215 + $0x10] sm:$0xff] %vm1474, %v1444
        %1478 = vst.msk [vmem:[%s215 + $0x18] sm:$0xff] %vm1474, %v1445
        %1479 = vst.msk [vmem:[%s215 + $0x20] sm:$0xff] %vm1474, %v1446
        %1480 = vst.msk [vmem:[%s215 + $0x28] sm:$0xff] %vm1474, %v1447
        %1481 = vst.msk [vmem:[%s215 + $0x30] sm:$0xff] %vm1474, %v1448
        %1482 = vst.msk [vmem:[%s215 + $0x38] sm:$0xff] %vm1474, %v1449
        %1483 = vst.msk [vmem:[%s215 + $0x40] sm:$0xff] %vm1474, %v1450
        %1484 = vst.msk [vmem:[%s215 + $0x48] sm:$0xff] %vm1474, %v1451
        %1485 = vst.msk [vmem:[%s215 + $0x50] sm:$0xff] %vm1474, %v1452
        %1486 = vst.msk [vmem:[%s215 + $0x58] sm:$0xff] %vm1474, %v1453
        %1487 = vst.msk [vmem:[%s215 + $0x60] sm:$0xff] %vm1474, %v1454
        %1488 = vst.msk [vmem:[%s215 + $0x68] sm:$0xff] %vm1474, %v1455
        %1489 = vst.msk [vmem:[%s215 + $0x70] sm:$0xff] %vm1474, %v1456
        %1490 = vst.msk [vmem:[%s215 + $0x78] sm:$0xff] %vm1474, %v1457
        %1491 = vst.msk [vmem:[%s215 + $0x80] sm:$0xff] %vm1474, %v1458
        %1492 = vst.msk [vmem:[%s215 + $0x88] sm:$0xff] %vm1474, %v1459
        %1493 = vst.msk [vmem:[%s215 + $0x90] sm:$0xff] %vm1474, %v1460
        %1494 = vst.msk [vmem:[%s215 + $0x98] sm:$0xff] %vm1474, %v1461
        %1495 = vst.msk [vmem:[%s215 + $0xa0] sm:$0xff] %vm1474, %v1462
        %1496 = vst.msk [vmem:[%s215 + $0xa8] sm:$0xff] %vm1474, %v1463
        %1497 = vst.msk [vmem:[%s215 + $0xb0] sm:$0xff] %vm1474, %v1464
        %1498 = vst.msk [vmem:[%s215 + $0xb8] sm:$0xff] %vm1474, %v1465
        %1499 = vst.msk [vmem:[%s215 + $0xc0] sm:$0xff] %vm1474, %v1466
        %1500 = vst.msk [vmem:[%s215 + $0xc8] sm:$0xff] %vm1474, %v1467
        %1501 = vst.msk [vmem:[%s215 + $0xd0] sm:$0xff] %vm1474, %v1468
        %1502 = vst.msk [vmem:[%s215 + $0xd8] sm:$0xff] %vm1474, %v1469
        %1503 = vst.msk [vmem:[%s215 + $0xe0] sm:$0xff] %vm1474, %v1470
        %1504 = vst.msk [vmem:[%s215 + $0xe8] sm:$0xff] %vm1474, %v1471
        %1505 = vst.msk [vmem:[%s215 + $0xf0] sm:$0xff] %vm1474, %v1472
        %1506 = vst.msk [vmem:[%s215 + $0xf8] sm:$0xff] %vm1474, %v1473
        %s1507 = sand.u32 %s132, 1
        %s1508 = scalar_lea.sflag [#allocation4], %s1507
        %s1509 = sand.u32 %s132, 1
        %s1510 = smul.addr %s1509, 256
        %s1511 = scalar_lea.vmem [#allocation3], %s1510
        // Predicated region
        $region37: #{tpu_custom_call.1} parent=35 // pred_check
          %p1512 = pneg %p142
        $region38: #{tpu_custom_call.1} parent=35 // pred_check_branch
          %1514 = sbr.rel (%p1512) target = $region40
        $region39: #{tpu_custom_call.1} parent=35 // pred_region
          %s1516 = ssub.s32 4096, 4096
          %1517 = vsyncadd %s1508, %s1516
          %s1518 = smul.addr %s24, 32
          %s1519 = smul.addr %s23, 32
          %s1520 = sadd.s32 %s1518, %s1519
          %s1521 = smul.addr %s1520, 128
          %s1522 = scalar_lea.hbm %s4, %s1521
          %s1523 = sshll.u32 %s1511, 4
          %s1524 = int_to_ptr.vmem [resolvable:$true] %s1523
          %1529 = dma.vmem_to_hbm [thread:$0]  %s1524, 4096, %s1522, %s1508, 128, 128, 8
        $region40: #{tpu_custom_call.1} parent=35 // pred_fallthru
          _
      $region36: #{tpu_custom_call.1} parent=5 // pred_fallthru
        _
      %p1530 = scmp.le.s32.totalorder 2, %s14
      // Predicated region
      $region41: #{tpu_custom_call.1} parent=5 // pred_check
        %p1531 = pneg %p1530
      $region42: #{tpu_custom_call.1} parent=5 // pred_check_branch
        %1533 = sbr.rel (%p1531) target = $region44
      $region43: #{tpu_custom_call.1} parent=5 // pred_region
        %s1534 = ssub.s32 %s14, 2
        // Predicated region
        $region45: #{tpu_custom_call.1} parent=43 // pred_check
          %p1535 = pneg %p148
        $region46: #{tpu_custom_call.1} parent=43 // pred_check_branch
          %1537 = sbr.rel (%p1535) target = $region48
        $region47: #{tpu_custom_call.1} parent=43 // pred_region
          %s1538 = sand.u32 %s133, 1
          %s1539 = scalar_lea.sflag [#allocation4], %s1538
          %s1540 = sand.u32 %s133, 1
          %s1541 = smul.addr %s1540, 256
          %s1542 = scalar_lea.vmem [#allocation3], %s1541
          %1543 = dma.done %s1539, 4096
        $region48: #{tpu_custom_call.1} parent=43 // pred_fallthru
          _
      $region44: #{tpu_custom_call.1} parent=5 // pred_fallthru
        _
    $region6: #{tpu_custom_call.1} parent=1 // loop_footer
      %s18 = sadd.s32 1, %s14
    $region7: #{tpu_custom_call.1} parent=1 // loop_footer_branch
      %13 = sbr.rel target = $region3
    $region8: #{tpu_custom_call.1} parent=1 // loop_exit
      _
    %1544 = vsyncpa [#allocation4], 1
    %s1545 = scalar_lea.sflag [#allocation4], 1
    %1546 = vsyncpa %s1545, 1

</llo_original>
